<compile_context>
chip_gen: v6e
topology: v6e:2x2x1
jax: 0.10.0
libtpu: 0.0.40
codegen_flags: <defaults>
</compile_context>

<pallas_src>
import functools

import jax
import jax.numpy as jnp
from jax import lax
from jax.experimental import pallas as pl
from jax.experimental.pallas import tpu as pltpu

STATE_DIM = 8
ACTION_DIM = 2
HIDDEN_DIM = 512
HEAD_DIM = 8          # packed head-weight width (actor cols 0:2, critic col 2, rest zero)
OUT_PAD = 128         # lane-dense f32 output slab width
SMALL_BATCH = 128     # single-tile latency regime
MAX_BATCH_TILE = 1024 # per-tile footprint ~18-20 MiB -> fits v7x 32 MiB scoped VMEM


def _round_up(x, m):
    return ((x + m - 1) // m) * m


def _tile_plan(B):
    """Returns (TB, Bp): batch-tile size (multiple of 8) and padded batch."""
    if B <= SMALL_BATCH:
        TB = _round_up(max(B, 1), 8)
        return TB, TB
    # >=2 grid steps so ("parallel",) shards across both TensorCores on v7x;
    # balanced tiles avoid up-to-2x padding waste for B just above MAX_BATCH_TILE.
    nt = max(2, pl.cdiv(B, MAX_BATCH_TILE))
    TB = _round_up(pl.cdiv(B, nt), 8)
    return TB, TB * nt


def _actor_critic_kernel(state_ref, w1_ref, w2_ref, wh_ref, b12_ref, bh_ref, out_ref):
    # state: (TB,8) f32 ; w1: (8,1024) bf16 ; w2: (512,1024) bf16 ; wh: (1024,8) bf16
    # b12: (2,1024) f32 ; bh: (1,8) f32 ; out: (TB,128) f32
    s = state_ref[...].astype(jnp.bfloat16)

    # ---- layer 1 (actor | critic fused along lanes): (TB,8) @ (8,1024) ----
    # Kept on the MXU despite K=8 (per review).
    h1 = jnp.dot(s, w1_ref[...], preferred_element_type=jnp.float32)
    h1 = jnp.maximum(h1 + b12_ref[0:1, :], 0.0).astype(jnp.bfloat16)

    # ---- layer 2: actor / critic halves kept separate (no lane concatenate) ----
    h2a = jnp.dot(h1[:, :HIDDEN_DIM], w2_ref[:, :HIDDEN_DIM],
                  preferred_element_type=jnp.float32)
    h2a = jnp.maximum(h2a + b12_ref[1:2, :HIDDEN_DIM], 0.0).astype(jnp.bfloat16)
    h2c = jnp.dot(h1[:, HIDDEN_DIM:], w2_ref[:, HIDDEN_DIM:],
                  preferred_element_type=jnp.float32)
    h2c = jnp.maximum(h2c + b12_ref[1:2, HIDDEN_DIM:], 0.0).astype(jnp.bfloat16)

    # ---- heads: sum of two (TB,512)@(512,8) matmuls ----
    # wh rows 0:512 carry actor_out (cols 0:2), rows 512:1024 carry critic_out (col 2).
    h3 = (jnp.dot(h2a, wh_ref[:HIDDEN_DIM, :], preferred_element_type=jnp.float32)
          + jnp.dot(h2c, wh_ref[HIDDEN_DIM:, :], preferred_element_type=jnp.float32)
          + bh_ref[...])
    col = lax.broadcasted_iota(jnp.int32, h3.shape, 1)
    # cols 0:2 = tanh(actor head), col 2 = critic value; cols 8:128 left unwritten.
    out_ref[:, :HEAD_DIM] = jnp.where(col < ACTION_DIM, jnp.tanh(h3), h3)


def _probe_kernel(x_ref, o_ref):
    o_ref[...] = x_ref[...] + 1.0


@functools.lru_cache(maxsize=None)
def _single_buffer_supported():
    """True iff this JAX/Mosaic build accepts pipeline_mode=pl.Buffered(1)."""
    try:
        fn = pl.pallas_call(
            _probe_kernel,
            out_shape=jax.ShapeDtypeStruct((16, 128), jnp.float32),
            grid=(2,),
            in_specs=[pl.BlockSpec((8, 128), lambda i: (0, 0),
                                   pipeline_mode=pl.Buffered(1))],
            out_specs=pl.BlockSpec((8, 128), lambda i: (i, 0)),
        )
        jax.block_until_ready(fn(jnp.zeros((8, 128), jnp.float32)))
        return True
    except Exception:
        return False


@functools.lru_cache(maxsize=None)
def _build_forward(B, TB, Bp, single_buffer):
    grid = (Bp // TB,)

    def resident(shape):
        # Constant index_map -> weights stay resident across batch tiles.
        # Single-buffer them when supported (frees ~1.3 MiB of VMEM).
        if single_buffer:
            return pl.BlockSpec(shape, lambda i: (0, 0), pipeline_mode=pl.Buffered(1))
        return pl.BlockSpec(shape, lambda i: (0, 0))

    @jax.jit
    def forward(state, w1, w2, wh, b12, bh):
        if Bp != B:
            state = jnp.pad(state, ((0, Bp - B), (0, 0)))
        out = pl.pallas_call(
            _actor_critic_kernel,
            out_shape=jax.ShapeDtypeStruct((Bp, OUT_PAD), jnp.float32),
            grid=grid,
            in_specs=[
                pl.BlockSpec((TB, STATE_DIM), lambda i: (i, 0)),
                resident((STATE_DIM, 2 * HIDDEN_DIM)),
                resident((HIDDEN_DIM, 2 * HIDDEN_DIM)),
                resident((2 * HIDDEN_DIM, HEAD_DIM)),
                resident((2, 2 * HIDDEN_DIM)),
                resident((1, HEAD_DIM)),
            ],
            out_specs=pl.BlockSpec((TB, OUT_PAD), lambda i: (i, 0)),
            compiler_params=pltpu.CompilerParams(
                dimension_semantics=("parallel",),
                vmem_limit_bytes=32 << 20,
            ),
        )(state, w1, w2, wh, b12, bh)
        action_mean = out[:B, :ACTION_DIM]
        value = out[:B, ACTION_DIM:ACTION_DIM + 1]
        return action_mean, value

    return forward


def actor_critic_forward(state, packed):
    """state: (B, STATE_DIM) f32 -> (action_mean (B, ACTION_DIM), value (B, 1))."""
    B = state.shape[0]
    TB, Bp = _tile_plan(B)
    fwd = _build_forward(B, TB, Bp, _single_buffer_supported())
    return fwd(state, packed["w1"], packed["w2"], packed["wh"],
               packed["b12"], packed["bh"])


def init_params(key):
    """Deterministic init mimicking nn.Linear's U(-1/sqrt(fan_in), 1/sqrt(fan_in)).
    Weights stored as (in_features, out_features)."""
    def linear(key, fan_in, fan_out):
        kw, kb = jax.random.split(key)
        bound = 1.0 / jnp.sqrt(fan_in)
        w = jax.random.uniform(kw, (fan_in, fan_out), jnp.float32, -bound, bound)
        b = jax.random.uniform(kb, (1, fan_out), jnp.float32, -bound, bound)
        return w, b

    keys = jax.random.split(key, 6)
    a_w1, a_b1 = linear(keys[0], STATE_DIM, HIDDEN_DIM)
    a_w2, a_b2 = linear(keys[1], HIDDEN_DIM, HIDDEN_DIM)
    a_w3, a_b3 = linear(keys[2], HIDDEN_DIM, ACTION_DIM)
    c_w1, c_b1 = linear(keys[3], STATE_DIM, HIDDEN_DIM)
    c_w2, c_b2 = linear(keys[4], HIDDEN_DIM, HIDDEN_DIM)
    c_w3, c_b3 = linear(keys[5], HIDDEN_DIM, 1)
    return dict(
        a_w1=a_w1, a_b1=a_b1, a_w2=a_w2, a_b2=a_b2, a_w3=a_w3, a_b3=a_b3,
        c_w1=c_w1, c_b1=c_b1, c_w2=c_w2, c_b2=c_b2, c_w3=c_w3, c_b3=c_b3,
    )


def pack_params(p):
    """One-time (non-jit-path) packing: fuse branches, pad heads, cast weights to bf16."""
    bf16 = jnp.bfloat16
    w1 = jnp.concatenate([p["a_w1"], p["c_w1"]], axis=1).astype(bf16)      # (8, 1024)
    w2 = jnp.concatenate([p["a_w2"], p["c_w2"]], axis=1).astype(bf16)      # (512, 1024)

    wh = jnp.zeros((2 * HIDDEN_DIM, HEAD_DIM), jnp.float32)
    wh = wh.at[:HIDDEN_DIM, :ACTION_DIM].set(p["a_w3"])
    wh = wh.at[HIDDEN_DIM:, ACTION_DIM:ACTION_DIM + 1].set(p["c_w3"])
    wh = wh.astype(bf16)                                                   # (1024, 8)

    b12 = jnp.stack([
        jnp.concatenate([p["a_b1"][0], p["c_b1"][0]]),
        jnp.concatenate([p["a_b2"][0], p["c_b2"][0]]),
    ]).astype(jnp.float32)                                                 # (2, 1024)

    bh = jnp.zeros((1, HEAD_DIM), jnp.float32)
    bh = bh.at[0, :ACTION_DIM].set(p["a_b3"][0])
    bh = bh.at[0, ACTION_DIM].set(p["c_b3"][0, 0])                         # (1, 8)

    return dict(w1=w1, w2=w2, wh=wh, b12=b12, bh=bh)


def reference_forward_f32(state, p):
    """Pure-JAX f32 reference matching the PyTorch forward exactly."""
    x = jax.nn.relu(state @ p["a_w1"] + p["a_b1"])
    x = jax.nn.relu(x @ p["a_w2"] + p["a_b2"])
    action_mean = jnp.tanh(x @ p["a_w3"] + p["a_b3"])
    v = jax.nn.relu(state @ p["c_w1"] + p["c_b1"])
    v = jax.nn.relu(v @ p["c_w2"] + p["c_b2"])
    value = v @ p["c_w3"] + p["c_b3"]
    return action_mean, value


def reference_forward_packed(state, packed):
    """Pure-JAX reference following the exact bf16/f32 path of the kernel."""
    bf16, f32 = jnp.bfloat16, jnp.float32
    h1 = jnp.dot(state.astype(bf16), packed["w1"], preferred_element_type=f32)
    h1 = jnp.maximum(h1 + packed["b12"][0:1, :], 0.0).astype(bf16)
    h2a = jnp.dot(h1[:, :HIDDEN_DIM], packed["w2"][:, :HIDDEN_DIM],
                  preferred_element_type=f32)
    h2a = jnp.maximum(h2a + packed["b12"][1:2, :HIDDEN_DIM], 0.0).astype(bf16)
    h2c = jnp.dot(h1[:, HIDDEN_DIM:], packed["w2"][:, HIDDEN_DIM:],
                  preferred_element_type=f32)
    h2c = jnp.maximum(h2c + packed["b12"][1:2, HIDDEN_DIM:], 0.0).astype(bf16)
    h3 = (jnp.dot(h2a, packed["wh"][:HIDDEN_DIM, :], preferred_element_type=f32)
          + jnp.dot(h2c, packed["wh"][HIDDEN_DIM:, :], preferred_element_type=f32)
          + packed["bh"])
    return jnp.tanh(h3[:, :ACTION_DIM]), h3[:, ACTION_DIM:ACTION_DIM + 1]


if __name__ == "__main__":
    key = jax.random.PRNGKey(0)
    k_params, k_state = jax.random.split(key)

    params = init_params(k_params)
    packed = jax.tree_util.tree_map(jax.block_until_ready, pack_params(params))

    # batch=8: single-tile latency path; batch=200: padded, 2-tile grid path.
    for batch in (8, 200):
        state = jax.random.normal(jax.random.fold_in(k_state, batch),
                                  (batch, STATE_DIM), jnp.float32)

        action_mean, value = actor_critic_forward(state, packed)
        jax.block_until_ready((action_mean, value))

        assert action_mean.shape == (batch, ACTION_DIM)
        assert value.shape == (batch, 1)

        # Tight check against a reference that follows the same bf16/f32 compute path.
        ref_a_p, ref_v_p = reference_forward_packed(state, packed)
        assert jnp.allclose(action_mean, ref_a_p, atol=2e-3, rtol=2e-3)
        assert jnp.allclose(value, ref_v_p, atol=2e-3, rtol=2e-3)

        # Looser check against the full-f32 PyTorch-equivalent reference
        # (bf16 weights introduce ~1e-3..1e-2 absolute error by design).
        ref_a, ref_v = reference_forward_f32(state, params)
        assert jnp.allclose(action_mean, ref_a, atol=5e-2, rtol=5e-2)
        assert jnp.allclose(value, ref_v, atol=5e-2, rtol=5e-2)

    print("KERNEL_OK")
</pallas_src>

<mosaic_0001>
module attributes {stable_mosaic.version = 11 : i64} {
  func.func @_probe_kernel(%arg0: i32, %arg1: memref<8x128xf32, #tpu.memory_space<vmem>>, %arg2: memref<8x128xf32, #tpu.memory_space<vmem>>) attributes {dimension_semantics = [#tpu.dimension_semantics<arbitrary>], iteration_bounds = array<i64: 2>, scalar_prefetch = 0 : i64, scratch_operands = 0 : i64, tpu.core_type = #tpu.core_type<tc>, window_params = [{pipeline_mode = #tpu.pipeline_mode<synchronous>, transform_indices = @transform_0, window_bounds = array<i64: 8, 128>}, {transform_indices = @transform_1, window_bounds = array<i64: 8, 128>}]} {
    %c0 = arith.constant 0 : index
    %c0_0 = arith.constant 0 : index
    %0 = vector.load %arg1[%c0, %c0_0] : memref<8x128xf32, #tpu.memory_space<vmem>>, vector<8x128xf32>
    %cst = arith.constant 1.000000e+00 : f32
    %1 = vector.broadcast %cst : f32 to vector<8x128xf32>
    %2 = arith.addf %0, %1 : vector<8x128xf32>
    %c0_1 = arith.constant 0 : index
    %c0_2 = arith.constant 0 : index
    %3 = vector.load %arg2[%c0_1, %c0_2] : memref<8x128xf32, #tpu.memory_space<vmem>>, vector<8x128xf32>
    tpu.vector_store %arg2[%c0_1, %c0_2], %2 {strides = array<i32>} : memref<8x128xf32, #tpu.memory_space<vmem>>, vector<8x128xf32>,
    return
  }
  func.func @transform_0(%arg0: i32) -> (i32, i32) {
    %c0_i32 = arith.constant 0 : i32
    %c0_i32_0 = arith.constant 0 : i32
    %c0_i32_1 = arith.constant 0 : i32
    return %c0_i32, %c0_i32_0 : i32, i32
  }
  func.func @transform_1(%arg0: i32) -> (i32, i32) {
    %c0_i32 = arith.constant 0 : i32
    %c0_i32_0 = arith.constant 0 : i32
    return %arg0, %c0_i32 : i32, i32
  }
}

module attributes {stable_mosaic.version = 11 : i64} {
  func.func @_actor_critic_kernel(%arg0: i32, %arg1: memref<8x8xf32, #tpu.memory_space<vmem>>, %arg2: memref<8x1024xbf16, #tpu.memory_space<vmem>>, %arg3: memref<512x1024xbf16, #tpu.memory_space<vmem>>, %arg4: memref<1024x8xbf16, #tpu.memory_space<vmem>>, %arg5: memref<2x1024xf32, #tpu.memory_space<vmem>>, %arg6: memref<1x8xf32, #tpu.memory_space<vmem>>, %arg7: memref<8x128xf32, #tpu.memory_space<vmem>>) attributes {dimension_semantics = [#tpu.dimension_semantics<parallel>], iteration_bounds = array<i64: 1>, scalar_prefetch = 0 : i64, scratch_operands = 0 : i64, tpu.core_type = #tpu.core_type<tc>, window_params = [{transform_indices = @transform_0, window_bounds = array<i64: 8, 8>}, {pipeline_mode = #tpu.pipeline_mode<synchronous>, transform_indices = @transform_1, window_bounds = array<i64: 8, 1024>}, {pipeline_mode = #tpu.pipeline_mode<synchronous>, transform_indices = @transform_2, window_bounds = array<i64: 512, 1024>}, {pipeline_mode = #tpu.pipeline_mode<synchronous>, transform_indices = @transform_3, window_bounds = array<i64: 1024, 8>}, {pipeline_mode = #tpu.pipeline_mode<synchronous>, transform_indices = @transform_4, window_bounds = array<i64: 2, 1024>}, {pipeline_mode = #tpu.pipeline_mode<synchronous>, transform_indices = @transform_5, window_bounds = array<i64: 1, 8>}, {transform_indices = @transform_6, window_bounds = array<i64: 8, 128>}]} {
    %c0 = arith.constant 0 : index
    %c0_0 = arith.constant 0 : index
    %0 = vector.load %arg1[%c0, %c0_0] : memref<8x8xf32, #tpu.memory_space<vmem>>, vector<8x8xf32>
    %1 = arith.truncf %0 : vector<8x8xf32> to vector<8x8xbf16>
    %c0_1 = arith.constant 0 : index
    %c0_2 = arith.constant 0 : index
    %2 = vector.load %arg2[%c0_1, %c0_2] : memref<8x1024xbf16, #tpu.memory_space<vmem>>, vector<8x1024xbf16>
    %cst = arith.constant dense<0.000000e+00> : vector<8x1024xf32>
    %3 = tpu.matmul %1, %2, %cst {dimension_numbers = #tpu.dot_dimension_numbers<[1], [0], [0], [1], [0, 0, 1, 1], [], []>} : vector<8x8xbf16>, vector<8x1024xbf16>, vector<8x1024xf32> -> vector<8x1024xf32>
    %c0_3 = arith.constant 0 : index
    %c0_4 = arith.constant 0 : index
    %4 = vector.load %arg5[%c0_3, %c0_4] : memref<2x1024xf32, #tpu.memory_space<vmem>>, vector<1x1024xf32>
    %5 = vector.broadcast %4 : vector<1x1024xf32> to vector<8x1024xf32>
    %6 = arith.addf %3, %5 : vector<8x1024xf32>
    %cst_5 = arith.constant 0.000000e+00 : f32
    %7 = vector.broadcast %cst_5 : f32 to vector<8x1024xf32>
    %8 = arith.maximumf %6, %7 : vector<8x1024xf32>
    %9 = arith.truncf %8 : vector<8x1024xf32> to vector<8x1024xbf16>
    %10 = vector.extract_strided_slice %9 {offsets = [0, 0], sizes = [8, 512], strides = [1, 1]} : vector<8x1024xbf16> to vector<8x512xbf16>
    %c0_6 = arith.constant 0 : index
    %c0_7 = arith.constant 0 : index
    %11 = vector.load %arg3[%c0_6, %c0_7] : memref<512x1024xbf16, #tpu.memory_space<vmem>>, vector<512x512xbf16>
    %cst_8 = arith.constant dense<0.000000e+00> : vector<8x512xf32>
    %12 = tpu.matmul %10, %11, %cst_8 {dimension_numbers = #tpu.dot_dimension_numbers<[1], [0], [0], [1], [0, 0, 1, 1], [], []>} : vector<8x512xbf16>, vector<512x512xbf16>, vector<8x512xf32> -> vector<8x512xf32>
    %c1 = arith.constant 1 : index
    %c0_9 = arith.constant 0 : index
    %13 = vector.load %arg5[%c1, %c0_9] : memref<2x1024xf32, #tpu.memory_space<vmem>>, vector<1x512xf32>
    %14 = vector.broadcast %13 : vector<1x512xf32> to vector<8x512xf32>
    %15 = arith.addf %12, %14 : vector<8x512xf32>
    %cst_10 = arith.constant 0.000000e+00 : f32
    %16 = vector.broadcast %cst_10 : f32 to vector<8x512xf32>
    %17 = arith.maximumf %15, %16 : vector<8x512xf32>
    %18 = arith.truncf %17 : vector<8x512xf32> to vector<8x512xbf16>
    %19 = vector.extract_strided_slice %9 {offsets = [0, 512], sizes = [8, 512], strides = [1, 1]} : vector<8x1024xbf16> to vector<8x512xbf16>
    %c0_11 = arith.constant 0 : index
    %c512 = arith.constant 512 : index
    %20 = vector.load %arg3[%c0_11, %c512] : memref<512x1024xbf16, #tpu.memory_space<vmem>>, vector<512x512xbf16>
    %cst_12 = arith.constant dense<0.000000e+00> : vector<8x512xf32>
    %21 = tpu.matmul %19, %20, %cst_12 {dimension_numbers = #tpu.dot_dimension_numbers<[1], [0], [0], [1], [0, 0, 1, 1], [], []>} : vector<8x512xbf16>, vector<512x512xbf16>, vector<8x512xf32> -> vector<8x512xf32>
    %c1_13 = arith.constant 1 : index
    %c512_14 = arith.constant 512 : index
    %22 = vector.load %arg5[%c1_13, %c512_14] : memref<2x1024xf32, #tpu.memory_space<vmem>>, vector<1x512xf32>
    %23 = vector.broadcast %22 : vector<1x512xf32> to vector<8x512xf32>
    %24 = arith.addf %21, %23 : vector<8x512xf32>
    %cst_15 = arith.constant 0.000000e+00 : f32
    %25 = vector.broadcast %cst_15 : f32 to vector<8x512xf32>
    %26 = arith.maximumf %24, %25 : vector<8x512xf32>
    %27 = arith.truncf %26 : vector<8x512xf32> to vector<8x512xbf16>
    %c0_16 = arith.constant 0 : index
    %c0_17 = arith.constant 0 : index
    %28 = vector.load %arg4[%c0_16, %c0_17] : memref<1024x8xbf16, #tpu.memory_space<vmem>>, vector<512x8xbf16>
    %cst_18 = arith.constant dense<0.000000e+00> : vector<8x8xf32>
    %29 = tpu.matmul %18, %28, %cst_18 {dimension_numbers = #tpu.dot_dimension_numbers<[1], [0], [0], [1], [0, 0, 1, 1], [], []>} : vector<8x512xbf16>, vector<512x8xbf16>, vector<8x8xf32> -> vector<8x8xf32>
    %c512_19 = arith.constant 512 : index
    %c0_20 = arith.constant 0 : index
    %30 = vector.load %arg4[%c512_19, %c0_20] : memref<1024x8xbf16, #tpu.memory_space<vmem>>, vector<512x8xbf16>
    %cst_21 = arith.constant dense<0.000000e+00> : vector<8x8xf32>
    %31 = tpu.matmul %27, %30, %cst_21 {dimension_numbers = #tpu.dot_dimension_numbers<[1], [0], [0], [1], [0, 0, 1, 1], [], []>} : vector<8x512xbf16>, vector<512x8xbf16>, vector<8x8xf32> -> vector<8x8xf32>
    %32 = arith.addf %29, %31 : vector<8x8xf32>
    %c0_22 = arith.constant 0 : index
    %c0_23 = arith.constant 0 : index
    %33 = vector.load %arg6[%c0_22, %c0_23] : memref<1x8xf32, #tpu.memory_space<vmem>>, vector<1x8xf32>
    %34 = vector.broadcast %33 : vector<1x8xf32> to vector<8x8xf32>
    %35 = arith.addf %32, %34 : vector<8x8xf32>
    %36 = tpu.iota {dimensions = array<i32: 1>} : vector<8x8xi32>
    %c2_i32 = arith.constant 2 : i32
    %37 = vector.broadcast %c2_i32 : i32 to vector<8x8xi32>
    %38 = arith.cmpi slt, %36, %37 : vector<8x8xi32>
    %39 = math.tanh %35 : vector<8x8xf32>
    %40 = arith.select %38, %39, %35 : vector<8x8xi1>, vector<8x8xf32>
    %c0_24 = arith.constant 0 : index
    %c0_25 = arith.constant 0 : index
    %41 = vector.load %arg7[%c0_24, %c0_25] : memref<8x128xf32, #tpu.memory_space<vmem>>, vector<8x8xf32>
    tpu.vector_store %arg7[%c0_24, %c0_25], %40 {strides = array<i32>} : memref<8x128xf32, #tpu.memory_space<vmem>>, vector<8x8xf32>,
    return
  }
  func.func @transform_0(%arg0: i32) -> (i32, i32) {
    %c0_i32 = arith.constant 0 : i32
    %c0_i32_0 = arith.constant 0 : i32
    return %arg0, %c0_i32 : i32, i32
  }
  func.func @transform_1(%arg0: i32) -> (i32, i32) {
    %c0_i32 = arith.constant 0 : i32
    %c0_i32_0 = arith.constant 0 : i32
    %c0_i32_1 = arith.constant 0 : i32
    return %c0_i32, %c0_i32_0 : i32, i32
  }
  func.func @transform_2(%arg0: i32) -> (i32, i32) {
    %c0_i32 = arith.constant 0 : i32
    %c0_i32_0 = arith.constant 0 : i32
    %c0_i32_1 = arith.constant 0 : i32
    return %c0_i32, %c0_i32_0 : i32, i32
  }
  func.func @transform_3(%arg0: i32) -> (i32, i32) {
    %c0_i32 = arith.constant 0 : i32
    %c0_i32_0 = arith.constant 0 : i32
    %c0_i32_1 = arith.constant 0 : i32
    return %c0_i32, %c0_i32_0 : i32, i32
  }
  func.func @transform_4(%arg0: i32) -> (i32, i32) {
    %c0_i32 = arith.constant 0 : i32
    %c0_i32_0 = arith.constant 0 : i32
    %c0_i32_1 = arith.constant 0 : i32
    return %c0_i32, %c0_i32_0 : i32, i32
  }
  func.func @transform_5(%arg0: i32) -> (i32, i32) {
    %c0_i32 = arith.constant 0 : i32
    %c0_i32_0 = arith.constant 0 : i32
    %c0_i32_1 = arith.constant 0 : i32
    return %c0_i32, %c0_i32_0 : i32, i32
  }
  func.func @transform_6(%arg0: i32) -> (i32, i32) {
    %c0_i32 = arith.constant 0 : i32
    %c0_i32_0 = arith.constant 0 : i32
    return %arg0, %c0_i32 : i32, i32
  }
}

</mosaic_0001>

<llo_original>
// kernel: tpu_custom_call.1
$region0: #{tpu_custom_call.1}
  #allocation0 [shape = 'u32[]', space=smem, size = 0x4, offset = 0x4, fixed_abs, tag = 'smem constant byte address 0x4 - core index']
  #allocation1 [shape = 'u32[144,128]{1,0:T(1,128)}', space=vmem, size = 0x12000, scoped, tag = 'internal scratch']
  %s0 = inlined_call_operand.hbm [shape: f32[8,128], index: 0, kind: input, shape index: {}]
  %s1 = inlined_call_operand.hbm [shape: f32[16,128], index: 1, kind: output, shape index: {}]
  %s2 = sld [smem:[#allocation0]]
  $region41: #{tpu_custom_call.1} parent=0
    _
  %s4 = ssub.s32 1, %s2
  %s5 = scalar_select 0, %s4, %s2
  $region1: #{tpu_custom_call.1} parent=0
    #allocation2 [shape = 'u8[4096]{0}', space=vmem, size = 0x1000, scoped, tag = 'input window, operand 0, single buffered']
    #allocation3 [shape = 's32[2]{0}', space=sflag, size = 0x8, scoped, tag = 'scoped memory for tpu_custom_call.1']
    #allocation4 [shape = 's32[2]{0}', space=sflag, size = 0x8, scoped, tag = 'scoped memory for tpu_custom_call.1']
    #allocation5 [shape = 'u8[8192]{0}', space=vmem, size = 0x2000, scoped, tag = 'output window, operand 0']
    %6 = vsyncpa [#allocation3], 0
    %7 = vsyncpa [#allocation4], 0
    %s8 = scalar_lea.sflag [#allocation4], 1
    %9 = vsyncpa %s8, 0
    loop: start=0, step=1, limit=4
    $region2: #{tpu_custom_call.1} parent=1 // loop_pre_header
      _
    $region3: #{tpu_custom_call.1} parent=1 // loop_header
      %s11 = sphi 0, %s15
      %p12 = scmp.ge.s32.totalorder %s11, 4
      %s19 = sphi 0, %s19
      %s21 = sphi 0, %s19
      %s22 = sphi 0, %s21
      %s36 = sphi 0, %s22
      %s42 = sphi 0, %s44
      %s45 = sphi 0, %s42
      %s46 = sphi 0, %s45
      %s62 = sphi 0, %s46
    $region4: #{tpu_custom_call.1} parent=1 // loop_header_branch
      %14 = sbr.rel (%p12) target = $region8
    $region5: #{tpu_custom_call.1} parent=1 // loop_body
      %s16 = ssub.s32 %s11, 1
      %s17 = ssub.s32 %s11, 2
      %s18 = sadd.s32 %s11, 1
      %s20 = sadd.s32 %s19, 1
      %p23 = scmp.eq.s32.totalorder %s11, 1
      %p24 = scmp.ne.s32.totalorder %s19, %s21
      %p25 = scmp.eq.s32.totalorder %s11, 0
      %p26 = por %p24, %p25
      %p27 = scmp.ne.s32.totalorder %s19, %s21
      %p28 = scmp.eq.s32.totalorder %s16, 1
      %p29 = por %p27, %p28
      %p30 = scmp.ne.s32.totalorder %s21, %s22
      %p31 = scmp.eq.s32.totalorder %s16, 0
      %p32 = por %p30, %p31
      %p33 = scmp.ne.s32.totalorder %s21, %s22
      %p34 = scmp.eq.s32.totalorder %s17, 1
      %p35 = por %p33, %p34
      %p37 = scmp.ne.s32.totalorder %s22, %s36
      %p38 = scmp.eq.s32.totalorder %s17, 0
      %p39 = por %p37, %p38
      %s40 = ssub.s32 %s11, %s18
      %p41 = scmp.eq.s32.totalorder %s40, 0
      %s43 = sadd.s32 %s42, 1
      %s44 = scalar_select %p41, %s42, %s43
      %p47 = pneg %p41
      %p48 = scmp.eq.s32.totalorder %s11, 1
      %p49 = por %p47, %p48
      %p50 = scmp.ne.s32.totalorder %s42, %s45
      %p51 = scmp.eq.s32.totalorder %s11, 0
      %p52 = por %p50, %p51
      %p53 = scmp.ne.s32.totalorder %s42, %s45
      %p54 = scmp.eq.s32.totalorder %s16, 1
      %p55 = por %p53, %p54
      %p56 = scmp.ne.s32.totalorder %s45, %s46
      %p57 = scmp.eq.s32.totalorder %s16, 0
      %p58 = por %p56, %p57
      %p59 = scmp.ne.s32.totalorder %s45, %s46
      %p60 = scmp.eq.s32.totalorder %s17, 1
      %p61 = por %p59, %p60
      %p63 = scmp.ne.s32.totalorder %s46, %s62
      %p64 = scmp.eq.s32.totalorder %s17, 0
      %p65 = por %p63, %p64
      %p66 = scmp.le.s32.totalorder 1, %s11
      %p67 = scmp.lt.s32.totalorder %s11, 3
      %p68 = pnand %p66, %p67
      %p69 = pneg %p68
      // Predicated region
      $region9: #{tpu_custom_call.1} parent=5 // pred_check
        _
      $region10: #{tpu_custom_call.1} parent=5 // pred_check_branch
        %71 = sbr.rel (%p68) target = $region12
      $region11: #{tpu_custom_call.1} parent=5 // pred_region
        %s72 = ssub.s32 %s11, 1
        // Predicated region
        $region13: #{tpu_custom_call.1} parent=11 // pred_check
          %p73 = pneg %p32
        $region14: #{tpu_custom_call.1} parent=11 // pred_check_branch
          %75 = sbr.rel (%p73) target = $region16
        $region15: #{tpu_custom_call.1} parent=11 // pred_region
          %s77 = ssub.s32 128, 128
          %78 = vsyncadd [#allocation3], %s77
          %s80 = sshll.u32 [#allocation2], 4
          %s81 = int_to_ptr.vmem [resolvable:$true] %s80
          %83 = dma.hbm_to_vmem [thread:$0]  %s0, 128, %s81, [#allocation3]
        $region16: #{tpu_custom_call.1} parent=11 // pred_fallthru
          _
      $region12: #{tpu_custom_call.1} parent=5 // pred_fallthru
        _
      %p84 = scmp.lt.s32.totalorder %s11, 2
      // Predicated region
      $region17: #{tpu_custom_call.1} parent=5 // pred_check
        %p85 = pneg %p84
      $region18: #{tpu_custom_call.1} parent=5 // pred_check_branch
        %87 = sbr.rel (%p85) target = $region20
      $region19: #{tpu_custom_call.1} parent=5 // pred_region
        _
      $region20: #{tpu_custom_call.1} parent=5 // pred_fallthru
        _
      %p88 = scmp.le.s32.totalorder 1, %s11
      %p89 = scmp.lt.s32.totalorder %s11, 3
      %p90 = pnand %p88, %p89
      %p91 = pneg %p90
      // Predicated region
      $region21: #{tpu_custom_call.1} parent=5 // pred_check
        _
      $region22: #{tpu_custom_call.1} parent=5 // pred_check_branch
        %93 = sbr.rel (%p90) target = $region24
      $region23: #{tpu_custom_call.1} parent=5 // pred_region
        %s94 = ssub.s32 %s11, 1
        // Predicated region
        $region25: #{tpu_custom_call.1} parent=23 // pred_check
          %p95 = pneg %p32
        $region26: #{tpu_custom_call.1} parent=23 // pred_check_branch
          %97 = sbr.rel (%p95) target = $region28
        $region27: #{tpu_custom_call.1} parent=23 // pred_region
          %98 = dma.done [#allocation3], 128
        $region28: #{tpu_custom_call.1} parent=23 // pred_fallthru
          _
        %p99 = pneg %p32
        %p100 = pneg %p29
        %p101 = pneg %p58
        %p102 = pneg %p55
        %s103 = sand.u32 %s45, 1
        %s104 = scalar_lea.sflag [#allocation4], %s103
        %s105 = sand.u32 %s45, 1
        %s106 = smul.addr %s105, 8
        %s107 = scalar_lea.vmem [#allocation5], %s106
        %v108 = vld [vmem:[#allocation2] sm:$0xff]
        %v109 = vadd.f32 %v108, 1.0
        %110 = vst [vmem:[%s107] sm:$0xff] %v109
        %s111 = sand.u32 %s45, 1
        %s112 = scalar_lea.sflag [#allocation4], %s111
        %s113 = sand.u32 %s45, 1
        %s114 = smul.addr %s113, 8
        %s115 = scalar_lea.vmem [#allocation5], %s114
        // Predicated region
        $region29: #{tpu_custom_call.1} parent=23 // pred_check
          %p116 = pneg %p55
        $region30: #{tpu_custom_call.1} parent=23 // pred_check_branch
          %118 = sbr.rel (%p116) target = $region32
        $region31: #{tpu_custom_call.1} parent=23 // pred_region
          %s120 = ssub.s32 128, 128
          %121 = vsyncadd %s112, %s120
          %s122 = smul.addr %s16, 128
          %s123 = scalar_lea.hbm %s1, %s122
          %s125 = sshll.u32 %s115, 4
          %s126 = int_to_ptr.vmem [resolvable:$true] %s125
          %128 = dma.vmem_to_hbm [thread:$0]  %s126, 128, %s123, %s112
        $region32: #{tpu_custom_call.1} parent=23 // pred_fallthru
          _
      $region24: #{tpu_custom_call.1} parent=5 // pred_fallthru
        _
      %p129 = scmp.le.s32.totalorder 2, %s11
      // Predicated region
      $region33: #{tpu_custom_call.1} parent=5 // pred_check
        %p130 = pneg %p129
      $region34: #{tpu_custom_call.1} parent=5 // pred_check_branch
        %132 = sbr.rel (%p130) target = $region36
      $region35: #{tpu_custom_call.1} parent=5 // pred_region
        %s133 = ssub.s32 %s11, 2
        // Predicated region
        $region37: #{tpu_custom_call.1} parent=35 // pred_check
          %p134 = pneg %p61
        $region38: #{tpu_custom_call.1} parent=35 // pred_check_branch
          %136 = sbr.rel (%p134) target = $region40
        $region39: #{tpu_custom_call.1} parent=35 // pred_region
          %s137 = sand.u32 %s46, 1
          %s138 = scalar_lea.sflag [#allocation4], %s137
          %s139 = sand.u32 %s46, 1
          %s140 = smul.addr %s139, 8
          %s141 = scalar_lea.vmem [#allocation5], %s140
          %142 = dma.done %s138, 128
        $region40: #{tpu_custom_call.1} parent=35 // pred_fallthru
          _
      $region36: #{tpu_custom_call.1} parent=5 // pred_fallthru
        _
    $region6: #{tpu_custom_call.1} parent=1 // loop_footer
      %s15 = sadd.s32 1, %s11
    $region7: #{tpu_custom_call.1} parent=1 // loop_footer_branch
      %10 = sbr.rel target = $region3
    $region8: #{tpu_custom_call.1} parent=1 // loop_exit
      _
    %143 = vsyncpa [#allocation3], 1
    %s144 = scalar_lea.sflag [#allocation3], 1
    %145 = vsyncpa %s144, 1
    %146 = vsyncpa [#allocation4], 1
    %s147 = scalar_lea.sflag [#allocation4], 1
    %148 = vsyncpa %s147, 1

// kernel: forward.1
$region0: #{forward.1}
  #allocation0 [shape = 'u32[]', space=smem, size = 0x4, offset = 0x4, fixed_abs, tag = 'smem constant byte address 0x4 - core index']
  #allocation1 [shape = 'u32[144,128]{1,0:T(1,128)}', space=vmem, size = 0x12000, scoped, tag = 'internal scratch']
  %s0 = inlined_call_operand.vmem [shape: f32[8,8], index: 0, kind: input, shape index: {}]
  %s1 = inlined_call_operand.vmem [shape: bf16[8,1024], index: 1, kind: input, shape index: {}]
  %s2 = inlined_call_operand.hbm [shape: bf16[512,1024], index: 2, kind: input, shape index: {}]
  %s3 = inlined_call_operand.vmem [shape: bf16[1024,8], index: 3, kind: input, shape index: {}]
  %s4 = inlined_call_operand.vmem [shape: f32[2,1024], index: 4, kind: input, shape index: {}]
  %s5 = inlined_call_operand.vmem [shape: f32[1,8], index: 5, kind: input, shape index: {}]
  %s6 = inlined_call_operand.vmem [shape: f32[8,128], index: 6, kind: output, shape index: {}]
  %s7 = sld [smem:[#allocation0]]
  $region38: #{forward.1} parent=0
    _
  %s9 = ssub.s32 1, %s7
  %s10 = scalar_select 0, %s9, %s7
  $region1: #{forward.1} parent=0
    #allocation2 [shape = 'u8[1048576]{0}', space=vmem, size = 0x100000, scoped, tag = 'input window, operand 2, single buffered']
    #allocation3 [shape = 's32[1]{0}', space=sflag, size = 0x4, scoped, tag = 'scoped memory for forward.1']
    %11 = vsyncpa [#allocation3], 0
    // Predicated region
    $region2: #{forward.1} parent=1 // pred_check
      _
    $region3: #{forward.1} parent=1 // pred_check_branch
      %13 = sbr.rel (0) target = $region5
    $region4: #{forward.1} parent=1 // pred_region
      _
    $region5: #{forward.1} parent=1 // pred_fallthru
      _
    // Predicated region
    $region6: #{forward.1} parent=1 // pred_check
      _
    $region7: #{forward.1} parent=1 // pred_check_branch
      %15 = sbr.rel (0) target = $region9
    $region8: #{forward.1} parent=1 // pred_region
      _
    $region9: #{forward.1} parent=1 // pred_fallthru
      _
    // Predicated region
    $region10: #{forward.1} parent=1 // pred_check
      _
    $region11: #{forward.1} parent=1 // pred_check_branch
      %17 = sbr.rel (0) target = $region13
    $region12: #{forward.1} parent=1 // pred_region
      %s19 = ssub.s32 32768, 32768
      %20 = vsyncadd [#allocation3], %s19
      %s21 = sshll.u32 [#allocation2], 4
      %s22 = int_to_ptr.vmem [resolvable:$true] %s21
      %27 = dma.hbm_to_vmem [thread:$0]  %s2, 32768, %s22, [#allocation3], 512, 512, 32
    $region13: #{forward.1} parent=1 // pred_fallthru
      _
    // Predicated region
    $region14: #{forward.1} parent=1 // pred_check
      _
    $region15: #{forward.1} parent=1 // pred_check_branch
      %29 = sbr.rel (0) target = $region17
    $region16: #{forward.1} parent=1 // pred_region
      _
    $region17: #{forward.1} parent=1 // pred_fallthru
      _
    // Predicated region
    $region18: #{forward.1} parent=1 // pred_check
      _
    $region19: #{forward.1} parent=1 // pred_check_branch
      %31 = sbr.rel (0) target = $region21
    $region20: #{forward.1} parent=1 // pred_region
      _
    $region21: #{forward.1} parent=1 // pred_fallthru
      _
    // Predicated region
    $region22: #{forward.1} parent=1 // pred_check
      _
    $region23: #{forward.1} parent=1 // pred_check_branch
      %33 = sbr.rel (0) target = $region25
    $region24: #{forward.1} parent=1 // pred_region
      _
    $region25: #{forward.1} parent=1 // pred_fallthru
      _
    // Predicated region
    $region26: #{forward.1} parent=1 // pred_check
      _
    $region27: #{forward.1} parent=1 // pred_check_branch
      %35 = sbr.rel (0) target = $region29
    $region28: #{forward.1} parent=1 // pred_region
      %36 = dma.done [#allocation3], 32768
    $region29: #{forward.1} parent=1 // pred_fallthru
      _
    %v38 = vld [vmem:[%s0] sm:$0xff]
    %v39 = vpack.c.bf16 %v38, %v38
    %v40 = vld [vmem:[%s1] sm:$0xff]
    %v41 = vld [vmem:[%s1 + $0x8] sm:$0xff]
    %v42 = vld [vmem:[%s1 + $0x10] sm:$0xff]
    %v43 = vld [vmem:[%s1 + $0x18] sm:$0xff]
    %v44 = vld [vmem:[%s4] ss:$2 sm:$0xff]
    %v46 = vlaneseq
    %v47 = vshrl.u32 %v46, 7
    %v48 = vsub.s32 0, %v47
    %v49 = vrot.slane %v44, %v48
    %v50 = vlaneseq
    %v51 = vshrl.u32 %v50, 7
    %v52 = vsub.s32 1, %v51
    %v53 = vrot.slane %v44, %v52
    %v54 = vlaneseq
    %v55 = vshrl.u32 %v54, 7
    %v56 = vsub.s32 2, %v55
    %v57 = vrot.slane %v44, %v56
    %v58 = vlaneseq
    %v59 = vshrl.u32 %v58, 7
    %v60 = vsub.s32 3, %v59
    %v61 = vrot.slane %v44, %v60
    %v62 = vlaneseq
    %v63 = vshrl.u32 %v62, 7
    %v64 = vsub.s32 4, %v63
    %v65 = vrot.slane %v44, %v64
    %v66 = vlaneseq
    %v67 = vshrl.u32 %v66, 7
    %v68 = vsub.s32 5, %v67
    %v69 = vrot.slane %v44, %v68
    %v70 = vlaneseq
    %v71 = vshrl.u32 %v70, 7
    %v72 = vsub.s32 6, %v71
    %v73 = vrot.slane %v44, %v72
    %v74 = vlaneseq
    %v75 = vshrl.u32 %v74, 7
    %v76 = vsub.s32 7, %v75
    %v77 = vrot.slane %v44, %v76
    %v90 = vunpack.c.l.b16 %v40
    %v91 = vunpack.c.h.b16 %v40
    %v92 = vunpack.c.l.b16 %v41
    %v93 = vunpack.c.h.b16 %v41
    %v94 = vunpack.c.l.b16 %v42
    %v95 = vunpack.c.h.b16 %v42
    %v96 = vunpack.c.l.b16 %v43
    %v97 = vunpack.c.h.b16 %v43
    %v98 = vpack.c.b16 %v90, %v90
    %v99 = vpack.c.b16 %v91, %v91
    %v100 = vpack.c.b16 %v92, %v92
    %v101 = vpack.c.b16 %v93, %v93
    %v102 = vpack.c.b16 %v94, %v94
    %v103 = vpack.c.b16 %v95, %v95
    %v104 = vpack.c.b16 %v96, %v96
    %v105 = vpack.c.b16 %v97, %v97
    %vm106 = vcmask 64512
    %v108 = vsel %vm106, %v39, 0
    %vm110 = vcmask 1043456
    %v112 = vsel %vm110, %v98, 0
    %v115 = vsel %vm110, %v99, 0
    %v118 = vsel %vm110, %v100, 0
    %v121 = vsel %vm110, %v101, 0
    %v124 = vsel %vm110, %v102, 0
    %v127 = vsel %vm110, %v103, 0
    %v130 = vsel %vm110, %v104, 0
    %v133 = vsel %vm110, %v105, 0
    %135 = vmatprep.subr.bf16.mxu0 0
    %136 = vmatpush1.bf16.msra.mxu0 0
    %137 = vmatprep.subr.bf16.mxu0 0
    %138 = vmatpush1.bf16.msra.mxu0 0
    %139 = vmatprep.subr.bf16.mxu0 0
    %140 = vmatpush1.bf16.msra.mxu0 0
    %141 = vmatprep.subr.bf16.mxu0 0
    %142 = vmatpush1.bf16.msra.mxu0 0
    %143 = vmatprep.subr.bf16.mxu0 0
    %144 = vmatpush1.bf16.msra.mxu0 0
    %145 = vmatprep.subr.bf16.mxu0 0
    %146 = vmatpush1.bf16.msra.mxu0 0
    %147 = vmatprep.subr.bf16.mxu0 0
    %148 = vmatpush1.bf16.msra.mxu0 0
    %149 = vmatprep.subr.bf16.mxu0 %v115
    %150 = vmatpush1.bf16.msra.mxu0 %v112
    %151 = vmatprep.subr.bf16.mxu0 0
    %152 = vmatpush2.bf16.msra.mxu0 0
    %153 = vmatprep.subr.bf16.mxu0 0
    %154 = vmatpush2.bf16.msra.mxu0 0
    %155 = vmatprep.subr.bf16.mxu0 0
    %156 = vmatpush2.bf16.msra.mxu0 0
    %157 = vmatprep.subr.bf16.mxu0 0
    %158 = vmatpush2.bf16.msra.mxu0 0
    %159 = vmatprep.subr.bf16.mxu0 0
    %160 = vmatpush2.bf16.msra.mxu0 0
    %161 = vmatprep.subr.bf16.mxu0 0
    %162 = vmatpush2.bf16.msra.mxu0 0
    %163 = vmatprep.subr.bf16.mxu0 0
    %164 = vmatpush2.bf16.msra.mxu0 0
    %165 = vmatprep.subr.bf16.mxu0 0
    %166 = vmatpush2.bf16.msra.mxu0 0
    %167 = vmatprep.mubr.bf16.mxu0 0
    %168 = vmatmul.mubr.bf16.gmra.mxu0 %v108
    %v169 = vpop.f32.mrf.mxu0
    %v170 = vadd.f32 %v49, %v169
    %v171 = vpop.f32.mrf.mxu0
    %v172 = vadd.f32 %v53, %v171
    %v173 = vpop.f32.mrf.mxu0
    %v174 = vpop.f32.mrf.mxu0
    %175 = vdwg.mxu0
    %176 = vmatprep.subr.bf16.mxu0 0
    %177 = vmatpush1.bf16.msra.mxu0 0
    %178 = vmatprep.subr.bf16.mxu0 0
    %179 = vmatpush1.bf16.msra.mxu0 0
    %180 = vmatprep.subr.bf16.mxu0 0
    %181 = vmatpush1.bf16.msra.mxu0 0
    %182 = vmatprep.subr.bf16.mxu0 0
    %183 = vmatpush1.bf16.msra.mxu0 0
    %184 = vmatprep.subr.bf16.mxu0 0
    %185 = vmatpush1.bf16.msra.mxu0 0
    %186 = vmatprep.subr.bf16.mxu0 0
    %187 = vmatpush1.bf16.msra.mxu0 0
    %188 = vmatprep.subr.bf16.mxu0 0
    %189 = vmatpush1.bf16.msra.mxu0 0
    %190 = vmatprep.subr.bf16.mxu0 %v121
    %191 = vmatpush1.bf16.msra.mxu0 %v118
    %192 = vmatprep.subr.bf16.mxu0 0
    %193 = vmatpush2.bf16.msra.mxu0 0
    %194 = vmatprep.subr.bf16.mxu0 0
    %195 = vmatpush2.bf16.msra.mxu0 0
    %196 = vmatprep.subr.bf16.mxu0 0
    %197 = vmatpush2.bf16.msra.mxu0 0
    %198 = vmatprep.subr.bf16.mxu0 0
    %199 = vmatpush2.bf16.msra.mxu0 0
    %200 = vmatprep.subr.bf16.mxu0 0
    %201 = vmatpush2.bf16.msra.mxu0 0
    %202 = vmatprep.subr.bf16.mxu0 0
    %203 = vmatpush2.bf16.msra.mxu0 0
    %204 = vmatprep.subr.bf16.mxu0 0
    %205 = vmatpush2.bf16.msra.mxu0 0
    %206 = vmatprep.subr.bf16.mxu0 0
    %207 = vmatpush2.bf16.msra.mxu0 0
    %208 = vmatprep.mubr.bf16.mxu0 0
    %209 = vmatmul.mubr.bf16.gmra.mxu0 %v108
    %v210 = vpop.f32.mrf.mxu0
    %v211 = vadd.f32 %v57, %v210
    %v212 = vpop.f32.mrf.mxu0
    %v213 = vadd.f32 %v61, %v212
    %v214 = vpop.f32.mrf.mxu0
    %v215 = vpop.f32.mrf.mxu0
    %216 = vdwg.mxu0
    %217 = vmatprep.subr.bf16.mxu0 0
    %218 = vmatpush1.bf16.msra.mxu0 0
    %219 = vmatprep.subr.bf16.mxu0 0
    %220 = vmatpush1.bf16.msra.mxu0 0
    %221 = vmatprep.subr.bf16.mxu0 0
    %222 = vmatpush1.bf16.msra.mxu0 0
    %223 = vmatprep.subr.bf16.mxu0 0
    %224 = vmatpush1.bf16.msra.mxu0 0
    %225 = vmatprep.subr.bf16.mxu0 0
    %226 = vmatpush1.bf16.msra.mxu0 0
    %227 = vmatprep.subr.bf16.mxu0 0
    %228 = vmatpush1.bf16.msra.mxu0 0
    %229 = vmatprep.subr.bf16.mxu0 0
    %230 = vmatpush1.bf16.msra.mxu0 0
    %231 = vmatprep.subr.bf16.mxu0 %v127
    %232 = vmatpush1.bf16.msra.mxu0 %v124
    %233 = vmatprep.subr.bf16.mxu0 0
    %234 = vmatpush2.bf16.msra.mxu0 0
    %235 = vmatprep.subr.bf16.mxu0 0
    %236 = vmatpush2.bf16.msra.mxu0 0
    %237 = vmatprep.subr.bf16.mxu0 0
    %238 = vmatpush2.bf16.msra.mxu0 0
    %239 = vmatprep.subr.bf16.mxu0 0
    %240 = vmatpush2.bf16.msra.mxu0 0
    %241 = vmatprep.subr.bf16.mxu0 0
    %242 = vmatpush2.bf16.msra.mxu0 0
    %243 = vmatprep.subr.bf16.mxu0 0
    %244 = vmatpush2.bf16.msra.mxu0 0
    %245 = vmatprep.subr.bf16.mxu0 0
    %246 = vmatpush2.bf16.msra.mxu0 0
    %247 = vmatprep.subr.bf16.mxu0 0
    %248 = vmatpush2.bf16.msra.mxu0 0
    %249 = vmatprep.mubr.bf16.mxu0 0
    %250 = vmatmul.mubr.bf16.gmra.mxu0 %v108
    %v251 = vpop.f32.mrf.mxu0
    %v252 = vadd.f32 %v65, %v251
    %v253 = vpop.f32.mrf.mxu0
    %v254 = vadd.f32 %v69, %v253
    %v255 = vpop.f32.mrf.mxu0
    %v256 = vpop.f32.mrf.mxu0
    %257 = vdwg.mxu0
    %258 = vmatprep.subr.bf16.mxu0 0
    %259 = vmatpush1.bf16.msra.mxu0 0
    %260 = vmatprep.subr.bf16.mxu0 0
    %261 = vmatpush1.bf16.msra.mxu0 0
    %262 = vmatprep.subr.bf16.mxu0 0
    %263 = vmatpush1.bf16.msra.mxu0 0
    %264 = vmatprep.subr.bf16.mxu0 0
    %265 = vmatpush1.bf16.msra.mxu0 0
    %266 = vmatprep.subr.bf16.mxu0 0
    %267 = vmatpush1.bf16.msra.mxu0 0
    %268 = vmatprep.subr.bf16.mxu0 0
    %269 = vmatpush1.bf16.msra.mxu0 0
    %270 = vmatprep.subr.bf16.mxu0 0
    %271 = vmatpush1.bf16.msra.mxu0 0
    %272 = vmatprep.subr.bf16.mxu0 %v133
    %273 = vmatpush1.bf16.msra.mxu0 %v130
    %274 = vmatprep.subr.bf16.mxu0 0
    %275 = vmatpush2.bf16.msra.mxu0 0
    %276 = vmatprep.subr.bf16.mxu0 0
    %277 = vmatpush2.bf16.msra.mxu0 0
    %278 = vmatprep.subr.bf16.mxu0 0
    %279 = vmatpush2.bf16.msra.mxu0 0
    %280 = vmatprep.subr.bf16.mxu0 0
    %281 = vmatpush2.bf16.msra.mxu0 0
    %282 = vmatprep.subr.bf16.mxu0 0
    %283 = vmatpush2.bf16.msra.mxu0 0
    %284 = vmatprep.subr.bf16.mxu0 0
    %285 = vmatpush2.bf16.msra.mxu0 0
    %286 = vmatprep.subr.bf16.mxu0 0
    %287 = vmatpush2.bf16.msra.mxu0 0
    %288 = vmatprep.subr.bf16.mxu0 0
    %289 = vmatpush2.bf16.msra.mxu0 0
    %290 = vmatprep.mubr.bf16.mxu0 0
    %291 = vmatmul.mubr.bf16.gmra.mxu0 %v108
    %v292 = vpop.f32.mrf.mxu0
    %v293 = vadd.f32 %v73, %v292
    %v294 = vpop.f32.mrf.mxu0
    %v295 = vadd.f32 %v77, %v294
    %v296 = vpop.f32.mrf.mxu0
    %v297 = vpop.f32.mrf.mxu0
    %298 = vdwg.mxu0
    %v299 = vmax.f32 %v170, 0.0
    %v300 = vmax.f32 %v172, 0.0
    %v301 = vmax.f32 %v211, 0.0
    %v302 = vmax.f32 %v213, 0.0
    %v303 = vmax.f32 %v252, 0.0
    %v304 = vmax.f32 %v254, 0.0
    %v305 = vmax.f32 %v293, 0.0
    %v306 = vmax.f32 %v295, 0.0
    %v307 = vpack.c.bf16 %v299, %v299
    %v308 = vpack.c.bf16 %v300, %v300
    %v309 = vpack.c.bf16 %v301, %v301
    %v310 = vpack.c.bf16 %v302, %v302
    %v311 = vpack.c.bf16 %v303, %v303
    %v312 = vpack.c.bf16 %v304, %v304
    %v313 = vpack.c.bf16 %v305, %v305
    %v314 = vpack.c.bf16 %v306, %v306
    %v315 = vld [vmem:[#allocation2] sm:$0xff]
    %v316 = vld [vmem:[#allocation2 + $0x8] sm:$0xff]
    %v317 = vld [vmem:[#allocation2 + $0x20] sm:$0xff]
    %v318 = vld [vmem:[#allocation2 + $0x28] sm:$0xff]
    %v319 = vld [vmem:[#allocation2 + $0x40] sm:$0xff]
    %v320 = vld [vmem:[#allocation2 + $0x48] sm:$0xff]
    %v321 = vld [vmem:[#allocation2 + $0x60] sm:$0xff]
    %v322 = vld [vmem:[#allocation2 + $0x68] sm:$0xff]
    %v323 = vld [vmem:[#allocation2 + $0x80] sm:$0xff]
    %v324 = vld [vmem:[#allocation2 + $0x88] sm:$0xff]
    %v325 = vld [vmem:[#allocation2 + $0xa0] sm:$0xff]
    %v326 = vld [vmem:[#allocation2 + $0xa8] sm:$0xff]
    %v327 = vld [vmem:[#allocation2 + $0xc0] sm:$0xff]
    %v328 = vld [vmem:[#allocation2 + $0xc8] sm:$0xff]
    %v329 = vld [vmem:[#allocation2 + $0xe0] sm:$0xff]
    %v330 = vld [vmem:[#allocation2 + $0xe8] sm:$0xff]
    %v331 = vld [vmem:[#allocation2 + $0x100] sm:$0xff]
    %v332 = vld [vmem:[#allocation2 + $0x108] sm:$0xff]
    %v333 = vld [vmem:[#allocation2 + $0x120] sm:$0xff]
    %v334 = vld [vmem:[#allocation2 + $0x128] sm:$0xff]
    %v335 = vld [vmem:[#allocation2 + $0x140] sm:$0xff]
    %v336 = vld [vmem:[#allocation2 + $0x148] sm:$0xff]
    %v337 = vld [vmem:[#allocation2 + $0x160] sm:$0xff]
    %v338 = vld [vmem:[#allocation2 + $0x168] sm:$0xff]
    %v339 = vld [vmem:[#allocation2 + $0x180] sm:$0xff]
    %v340 = vld [vmem:[#allocation2 + $0x188] sm:$0xff]
    %v341 = vld [vmem:[#allocation2 + $0x1a0] sm:$0xff]
    %v342 = vld [vmem:[#allocation2 + $0x1a8] sm:$0xff]
    %v343 = vld [vmem:[#allocation2 + $0x1c0] sm:$0xff]
    %v344 = vld [vmem:[#allocation2 + $0x1c8] sm:$0xff]
    %v345 = vld [vmem:[#allocation2 + $0x1e0] sm:$0xff]
    %v346 = vld [vmem:[#allocation2 + $0x1e8] sm:$0xff]
    %v347 = vld [vmem:[#allocation2 + $0x200] sm:$0xff]
    %v348 = vld [vmem:[#allocation2 + $0x208] sm:$0xff]
    %v349 = vld [vmem:[#allocation2 + $0x220] sm:$0xff]
    %v350 = vld [vmem:[#allocation2 + $0x228] sm:$0xff]
    %v351 = vld [vmem:[#allocation2 + $0x240] sm:$0xff]
    %v352 = vld [vmem:[#allocation2 + $0x248] sm:$0xff]
    %v353 = vld [vmem:[#allocation2 + $0x260] sm:$0xff]
    %v354 = vld [vmem:[#allocation2 + $0x268] sm:$0xff]
    %v355 = vld [vmem:[#allocation2 + $0x280] sm:$0xff]
    %v356 = vld [vmem:[#allocation2 + $0x288] sm:$0xff]
    %v357 = vld [vmem:[#allocation2 + $0x2a0] sm:$0xff]
    %v358 = vld [vmem:[#allocation2 + $0x2a8] sm:$0xff]
    %v359 = vld [vmem:[#allocation2 + $0x2c0] sm:$0xff]
    %v360 = vld [vmem:[#allocation2 + $0x2c8] sm:$0xff]
    %v361 = vld [vmem:[#allocation2 + $0x2e0] sm:$0xff]
    %v362 = vld [vmem:[#allocation2 + $0x2e8] sm:$0xff]
    %v363 = vld [vmem:[#allocation2 + $0x300] sm:$0xff]
    %v364 = vld [vmem:[#allocation2 + $0x308] sm:$0xff]
    %v365 = vld [vmem:[#allocation2 + $0x320] sm:$0xff]
    %v366 = vld [vmem:[#allocation2 + $0x328] sm:$0xff]
    %v367 = vld [vmem:[#allocation2 + $0x340] sm:$0xff]
    %v368 = vld [vmem:[#allocation2 + $0x348] sm:$0xff]
    %v369 = vld [vmem:[#allocation2 + $0x360] sm:$0xff]
    %v370 = vld [vmem:[#allocation2 + $0x368] sm:$0xff]
    %v371 = vld [vmem:[#allocation2 + $0x380] sm:$0xff]
    %v372 = vld [vmem:[#allocation2 + $0x388] sm:$0xff]
    %v373 = vld [vmem:[#allocation2 + $0x3a0] sm:$0xff]
    %v374 = vld [vmem:[#allocation2 + $0x3a8] sm:$0xff]
    %v375 = vld [vmem:[#allocation2 + $0x3c0] sm:$0xff]
    %v376 = vld [vmem:[#allocation2 + $0x3c8] sm:$0xff]
    %v377 = vld [vmem:[#allocation2 + $0x3e0] sm:$0xff]
    %v378 = vld [vmem:[#allocation2 + $0x3e8] sm:$0xff]
    %v379 = vld [vmem:[#allocation2 + $0x400] sm:$0xff]
    %v380 = vld [vmem:[#allocation2 + $0x408] sm:$0xff]
    %v381 = vld [vmem:[#allocation2 + $0x420] sm:$0xff]
    %v382 = vld [vmem:[#allocation2 + $0x428] sm:$0xff]
    %v383 = vld [vmem:[#allocation2 + $0x440] sm:$0xff]
    %v384 = vld [vmem:[#allocation2 + $0x448] sm:$0xff]
    %v385 = vld [vmem:[#allocation2 + $0x460] sm:$0xff]
    %v386 = vld [vmem:[#allocation2 + $0x468] sm:$0xff]
    %v387 = vld [vmem:[#allocation2 + $0x480] sm:$0xff]
    %v388 = vld [vmem:[#allocation2 + $0x488] sm:$0xff]
    %v389 = vld [vmem:[#allocation2 + $0x4a0] sm:$0xff]
    %v390 = vld [vmem:[#allocation2 + $0x4a8] sm:$0xff]
    %v391 = vld [vmem:[#allocation2 + $0x4c0] sm:$0xff]
    %v392 = vld [vmem:[#allocation2 + $0x4c8] sm:$0xff]
    %v393 = vld [vmem:[#allocation2 + $0x4e0] sm:$0xff]
    %v394 = vld [vmem:[#allocation2 + $0x4e8] sm:$0xff]
    %v395 = vld [vmem:[#allocation2 + $0x500] sm:$0xff]
    %v396 = vld [vmem:[#allocation2 + $0x508] sm:$0xff]
    %v397 = vld [vmem:[#allocation2 + $0x520] sm:$0xff]
    %v398 = vld [vmem:[#allocation2 + $0x528] sm:$0xff]
    %v399 = vld [vmem:[#allocation2 + $0x540] sm:$0xff]
    %v400 = vld [vmem:[#allocation2 + $0x548] sm:$0xff]
    %v401 = vld [vmem:[#allocation2 + $0x560] sm:$0xff]
    %v402 = vld [vmem:[#allocation2 + $0x568] sm:$0xff]
    %v403 = vld [vmem:[#allocation2 + $0x580] sm:$0xff]
    %v404 = vld [vmem:[#allocation2 + $0x588] sm:$0xff]
    %v405 = vld [vmem:[#allocation2 + $0x5a0] sm:$0xff]
    %v406 = vld [vmem:[#allocation2 + $0x5a8] sm:$0xff]
    %v407 = vld [vmem:[#allocation2 + $0x5c0] sm:$0xff]
    %v408 = vld [vmem:[#allocation2 + $0x5c8] sm:$0xff]
    %v409 = vld [vmem:[#allocation2 + $0x5e0] sm:$0xff]
    %v410 = vld [vmem:[#allocation2 + $0x5e8] sm:$0xff]
    %v411 = vld [vmem:[#allocation2 + $0x600] sm:$0xff]
    %v412 = vld [vmem:[#allocation2 + $0x608] sm:$0xff]
    %v413 = vld [vmem:[#allocation2 + $0x620] sm:$0xff]
    %v414 = vld [vmem:[#allocation2 + $0x628] sm:$0xff]
    %v415 = vld [vmem:[#allocation2 + $0x640] sm:$0xff]
    %v416 = vld [vmem:[#allocation2 + $0x648] sm:$0xff]
    %v417 = vld [vmem:[#allocation2 + $0x660] sm:$0xff]
    %v418 = vld [vmem:[#allocation2 + $0x668] sm:$0xff]
    %v419 = vld [vmem:[#allocation2 + $0x680] sm:$0xff]
    %v420 = vld [vmem:[#allocation2 + $0x688] sm:$0xff]
    %v421 = vld [vmem:[#allocation2 + $0x6a0] sm:$0xff]
    %v422 = vld [vmem:[#allocation2 + $0x6a8] sm:$0xff]
    %v423 = vld [vmem:[#allocation2 + $0x6c0] sm:$0xff]
    %v424 = vld [vmem:[#allocation2 + $0x6c8] sm:$0xff]
    %v425 = vld [vmem:[#allocation2 + $0x6e0] sm:$0xff]
    %v426 = vld [vmem:[#allocation2 + $0x6e8] sm:$0xff]
    %v427 = vld [vmem:[#allocation2 + $0x700] sm:$0xff]
    %v428 = vld [vmem:[#allocation2 + $0x708] sm:$0xff]
    %v429 = vld [vmem:[#allocation2 + $0x720] sm:$0xff]
    %v430 = vld [vmem:[#allocation2 + $0x728] sm:$0xff]
    %v431 = vld [vmem:[#allocation2 + $0x740] sm:$0xff]
    %v432 = vld [vmem:[#allocation2 + $0x748] sm:$0xff]
    %v433 = vld [vmem:[#allocation2 + $0x760] sm:$0xff]
    %v434 = vld [vmem:[#allocation2 + $0x768] sm:$0xff]
    %v435 = vld [vmem:[#allocation2 + $0x780] sm:$0xff]
    %v436 = vld [vmem:[#allocation2 + $0x788] sm:$0xff]
    %v437 = vld [vmem:[#allocation2 + $0x7a0] sm:$0xff]
    %v438 = vld [vmem:[#allocation2 + $0x7a8] sm:$0xff]
    %v439 = vld [vmem:[#allocation2 + $0x7c0] sm:$0xff]
    %v440 = vld [vmem:[#allocation2 + $0x7c8] sm:$0xff]
    %v441 = vld [vmem:[#allocation2 + $0x7e0] sm:$0xff]
    %v442 = vld [vmem:[#allocation2 + $0x7e8] sm:$0xff]
    %s443 = scalar_lea.vmem %s4, 1
    %v444 = vld [vmem:[%s443] ss:$2 sm:$0xf]
    %v446 = vlaneseq
    %v447 = vshrl.u32 %v446, 7
    %v448 = vsub.s32 0, %v447
    %v449 = vrot.slane %v444, %v448
    %v450 = vlaneseq
    %v451 = vshrl.u32 %v450, 7
    %v452 = vsub.s32 1, %v451
    %v453 = vrot.slane %v444, %v452
    %v454 = vlaneseq
    %v455 = vshrl.u32 %v454, 7
    %v456 = vsub.s32 2, %v455
    %v457 = vrot.slane %v444, %v456
    %v458 = vlaneseq
    %v459 = vshrl.u32 %v458, 7
    %v460 = vsub.s32 3, %v459
    %v461 = vrot.slane %v444, %v460
    %v594 = vunpack.c.l.b16 %v315
    %v595 = vunpack.c.h.b16 %v315
    %v596 = vunpack.c.l.b16 %v316
    %v597 = vunpack.c.h.b16 %v316
    %v598 = vunpack.c.l.b16 %v317
    %v599 = vunpack.c.h.b16 %v317
    %v600 = vunpack.c.l.b16 %v318
    %v601 = vunpack.c.h.b16 %v318
    %v602 = vunpack.c.l.b16 %v319
    %v603 = vunpack.c.h.b16 %v319
    %v604 = vunpack.c.l.b16 %v320
    %v605 = vunpack.c.h.b16 %v320
    %v606 = vunpack.c.l.b16 %v321
    %v607 = vunpack.c.h.b16 %v321
    %v608 = vunpack.c.l.b16 %v322
    %v609 = vunpack.c.h.b16 %v322
    %v610 = vunpack.c.l.b16 %v323
    %v611 = vunpack.c.h.b16 %v323
    %v612 = vunpack.c.l.b16 %v324
    %v613 = vunpack.c.h.b16 %v324
    %v614 = vunpack.c.l.b16 %v325
    %v615 = vunpack.c.h.b16 %v325
    %v616 = vunpack.c.l.b16 %v326
    %v617 = vunpack.c.h.b16 %v326
    %v618 = vunpack.c.l.b16 %v327
    %v619 = vunpack.c.h.b16 %v327
    %v620 = vunpack.c.l.b16 %v328
    %v621 = vunpack.c.h.b16 %v328
    %v622 = vunpack.c.l.b16 %v329
    %v623 = vunpack.c.h.b16 %v329
    %v624 = vunpack.c.l.b16 %v330
    %v625 = vunpack.c.h.b16 %v330
    %v626 = vunpack.c.l.b16 %v331
    %v627 = vunpack.c.h.b16 %v331
    %v628 = vunpack.c.l.b16 %v332
    %v629 = vunpack.c.h.b16 %v332
    %v630 = vunpack.c.l.b16 %v333
    %v631 = vunpack.c.h.b16 %v333
    %v632 = vunpack.c.l.b16 %v334
    %v633 = vunpack.c.h.b16 %v334
    %v634 = vunpack.c.l.b16 %v335
    %v635 = vunpack.c.h.b16 %v335
    %v636 = vunpack.c.l.b16 %v336
    %v637 = vunpack.c.h.b16 %v336
    %v638 = vunpack.c.l.b16 %v337
    %v639 = vunpack.c.h.b16 %v337
    %v640 = vunpack.c.l.b16 %v338
    %v641 = vunpack.c.h.b16 %v338
    %v642 = vunpack.c.l.b16 %v339
    %v643 = vunpack.c.h.b16 %v339
    %v644 = vunpack.c.l.b16 %v340
    %v645 = vunpack.c.h.b16 %v340
    %v646 = vunpack.c.l.b16 %v341
    %v647 = vunpack.c.h.b16 %v341
    %v648 = vunpack.c.l.b16 %v342
    %v649 = vunpack.c.h.b16 %v342
    %v650 = vunpack.c.l.b16 %v343
    %v651 = vunpack.c.h.b16 %v343
    %v652 = vunpack.c.l.b16 %v344
    %v653 = vunpack.c.h.b16 %v344
    %v654 = vunpack.c.l.b16 %v345
    %v655 = vunpack.c.h.b16 %v345
    %v656 = vunpack.c.l.b16 %v346
    %v657 = vunpack.c.h.b16 %v346
    %v658 = vunpack.c.l.b16 %v347
    %v659 = vunpack.c.h.b16 %v347
    %v660 = vunpack.c.l.b16 %v348
    %v661 = vunpack.c.h.b16 %v348
    %v662 = vunpack.c.l.b16 %v349
    %v663 = vunpack.c.h.b16 %v349
    %v664 = vunpack.c.l.b16 %v350
    %v665 = vunpack.c.h.b16 %v350
    %v666 = vunpack.c.l.b16 %v351
    %v667 = vunpack.c.h.b16 %v351
    %v668 = vunpack.c.l.b16 %v352
    %v669 = vunpack.c.h.b16 %v352
    %v670 = vunpack.c.l.b16 %v353
    %v671 = vunpack.c.h.b16 %v353
    %v672 = vunpack.c.l.b16 %v354
    %v673 = vunpack.c.h.b16 %v354
    %v674 = vunpack.c.l.b16 %v355
    %v675 = vunpack.c.h.b16 %v355
    %v676 = vunpack.c.l.b16 %v356
    %v677 = vunpack.c.h.b16 %v356
    %v678 = vunpack.c.l.b16 %v357
    %v679 = vunpack.c.h.b16 %v357
    %v680 = vunpack.c.l.b16 %v358
    %v681 = vunpack.c.h.b16 %v358
    %v682 = vunpack.c.l.b16 %v359
    %v683 = vunpack.c.h.b16 %v359
    %v684 = vunpack.c.l.b16 %v360
    %v685 = vunpack.c.h.b16 %v360
    %v686 = vunpack.c.l.b16 %v361
    %v687 = vunpack.c.h.b16 %v361
    %v688 = vunpack.c.l.b16 %v362
    %v689 = vunpack.c.h.b16 %v362
    %v690 = vunpack.c.l.b16 %v363
    %v691 = vunpack.c.h.b16 %v363
    %v692 = vunpack.c.l.b16 %v364
    %v693 = vunpack.c.h.b16 %v364
    %v694 = vunpack.c.l.b16 %v365
    %v695 = vunpack.c.h.b16 %v365
    %v696 = vunpack.c.l.b16 %v366
    %v697 = vunpack.c.h.b16 %v366
    %v698 = vunpack.c.l.b16 %v367
    %v699 = vunpack.c.h.b16 %v367
    %v700 = vunpack.c.l.b16 %v368
    %v701 = vunpack.c.h.b16 %v368
    %v702 = vunpack.c.l.b16 %v369
    %v703 = vunpack.c.h.b16 %v369
    %v704 = vunpack.c.l.b16 %v370
    %v705 = vunpack.c.h.b16 %v370
    %v706 = vunpack.c.l.b16 %v371
    %v707 = vunpack.c.h.b16 %v371
    %v708 = vunpack.c.l.b16 %v372
    %v709 = vunpack.c.h.b16 %v372
    %v710 = vunpack.c.l.b16 %v373
    %v711 = vunpack.c.h.b16 %v373
    %v712 = vunpack.c.l.b16 %v374
    %v713 = vunpack.c.h.b16 %v374
    %v714 = vunpack.c.l.b16 %v375
    %v715 = vunpack.c.h.b16 %v375
    %v716 = vunpack.c.l.b16 %v376
    %v717 = vunpack.c.h.b16 %v376
    %v718 = vunpack.c.l.b16 %v377
    %v719 = vunpack.c.h.b16 %v377
    %v720 = vunpack.c.l.b16 %v378
    %v721 = vunpack.c.h.b16 %v378
    %v722 = vunpack.c.l.b16 %v379
    %v723 = vunpack.c.h.b16 %v379
    %v724 = vunpack.c.l.b16 %v380
    %v725 = vunpack.c.h.b16 %v380
    %v726 = vunpack.c.l.b16 %v381
    %v727 = vunpack.c.h.b16 %v381
    %v728 = vunpack.c.l.b16 %v382
    %v729 = vunpack.c.h.b16 %v382
    %v730 = vunpack.c.l.b16 %v383
    %v731 = vunpack.c.h.b16 %v383
    %v732 = vunpack.c.l.b16 %v384
    %v733 = vunpack.c.h.b16 %v384
    %v734 = vunpack.c.l.b16 %v385
    %v735 = vunpack.c.h.b16 %v385
    %v736 = vunpack.c.l.b16 %v386
    %v737 = vunpack.c.h.b16 %v386
    %v738 = vunpack.c.l.b16 %v387
    %v739 = vunpack.c.h.b16 %v387
    %v740 = vunpack.c.l.b16 %v388
    %v741 = vunpack.c.h.b16 %v388
    %v742 = vunpack.c.l.b16 %v389
    %v743 = vunpack.c.h.b16 %v389
    %v744 = vunpack.c.l.b16 %v390
    %v745 = vunpack.c.h.b16 %v390
    %v746 = vunpack.c.l.b16 %v391
    %v747 = vunpack.c.h.b16 %v391
    %v748 = vunpack.c.l.b16 %v392
    %v749 = vunpack.c.h.b16 %v392
    %v750 = vunpack.c.l.b16 %v393
    %v751 = vunpack.c.h.b16 %v393
    %v752 = vunpack.c.l.b16 %v394
    %v753 = vunpack.c.h.b16 %v394
    %v754 = vunpack.c.l.b16 %v395
    %v755 = vunpack.c.h.b16 %v395
    %v756 = vunpack.c.l.b16 %v396
    %v757 = vunpack.c.h.b16 %v396
    %v758 = vunpack.c.l.b16 %v397
    %v759 = vunpack.c.h.b16 %v397
    %v760 = vunpack.c.l.b16 %v398
    %v761 = vunpack.c.h.b16 %v398
    %v762 = vunpack.c.l.b16 %v399
    %v763 = vunpack.c.h.b16 %v399
    %v764 = vunpack.c.l.b16 %v400
    %v765 = vunpack.c.h.b16 %v400
    %v766 = vunpack.c.l.b16 %v401
    %v767 = vunpack.c.h.b16 %v401
    %v768 = vunpack.c.l.b16 %v402
    %v769 = vunpack.c.h.b16 %v402
    %v770 = vunpack.c.l.b16 %v403
    %v771 = vunpack.c.h.b16 %v403
    %v772 = vunpack.c.l.b16 %v404
    %v773 = vunpack.c.h.b16 %v404
    %v774 = vunpack.c.l.b16 %v405
    %v775 = vunpack.c.h.b16 %v405
    %v776 = vunpack.c.l.b16 %v406
    %v777 = vunpack.c.h.b16 %v406
    %v778 = vunpack.c.l.b16 %v407
    %v779 = vunpack.c.h.b16 %v407
    %v780 = vunpack.c.l.b16 %v408
    %v781 = vunpack.c.h.b16 %v408
    %v782 = vunpack.c.l.b16 %v409
    %v783 = vunpack.c.h.b16 %v409
    %v784 = vunpack.c.l.b16 %v410
    %v785 = vunpack.c.h.b16 %v410
    %v786 = vunpack.c.l.b16 %v411
    %v787 = vunpack.c.h.b16 %v411
    %v788 = vunpack.c.l.b16 %v412
    %v789 = vunpack.c.h.b16 %v412
    %v790 = vunpack.c.l.b16 %v413
    %v791 = vunpack.c.h.b16 %v413
    %v792 = vunpack.c.l.b16 %v414
    %v793 = vunpack.c.h.b16 %v414
    %v794 = vunpack.c.l.b16 %v415
    %v795 = vunpack.c.h.b16 %v415
    %v796 = vunpack.c.l.b16 %v416
    %v797 = vunpack.c.h.b16 %v416
    %v798 = vunpack.c.l.b16 %v417
    %v799 = vunpack.c.h.b16 %v417
    %v800 = vunpack.c.l.b16 %v418
    %v801 = vunpack.c.h.b16 %v418
    %v802 = vunpack.c.l.b16 %v419
    %v803 = vunpack.c.h.b16 %v419
    %v804 = vunpack.c.l.b16 %v420
    %v805 = vunpack.c.h.b16 %v420
    %v806 = vunpack.c.l.b16 %v421
    %v807 = vunpack.c.h.b16 %v421
    %v808 = vunpack.c.l.b16 %v422
    %v809 = vunpack.c.h.b16 %v422
    %v810 = vunpack.c.l.b16 %v423
    %v811 = vunpack.c.h.b16 %v423
    %v812 = vunpack.c.l.b16 %v424
    %v813 = vunpack.c.h.b16 %v424
    %v814 = vunpack.c.l.b16 %v425
    %v815 = vunpack.c.h.b16 %v425
    %v816 = vunpack.c.l.b16 %v426
    %v817 = vunpack.c.h.b16 %v426
    %v818 = vunpack.c.l.b16 %v427
    %v819 = vunpack.c.h.b16 %v427
    %v820 = vunpack.c.l.b16 %v428
    %v821 = vunpack.c.h.b16 %v428
    %v822 = vunpack.c.l.b16 %v429
    %v823 = vunpack.c.h.b16 %v429
    %v824 = vunpack.c.l.b16 %v430
    %v825 = vunpack.c.h.b16 %v430
    %v826 = vunpack.c.l.b16 %v431
    %v827 = vunpack.c.h.b16 %v431
    %v828 = vunpack.c.l.b16 %v432
    %v829 = vunpack.c.h.b16 %v432
    %v830 = vunpack.c.l.b16 %v433
    %v831 = vunpack.c.h.b16 %v433
    %v832 = vunpack.c.l.b16 %v434
    %v833 = vunpack.c.h.b16 %v434
    %v834 = vunpack.c.l.b16 %v435
    %v835 = vunpack.c.h.b16 %v435
    %v836 = vunpack.c.l.b16 %v436
    %v837 = vunpack.c.h.b16 %v436
    %v838 = vunpack.c.l.b16 %v437
    %v839 = vunpack.c.h.b16 %v437
    %v840 = vunpack.c.l.b16 %v438
    %v841 = vunpack.c.h.b16 %v438
    %v842 = vunpack.c.l.b16 %v439
    %v843 = vunpack.c.h.b16 %v439
    %v844 = vunpack.c.l.b16 %v440
    %v845 = vunpack.c.h.b16 %v440
    %v846 = vunpack.c.l.b16 %v441
    %v847 = vunpack.c.h.b16 %v441
    %v848 = vunpack.c.l.b16 %v442
    %v849 = vunpack.c.h.b16 %v442
    %v850 = vpack.c.b16 %v598, %v594
    %v851 = vpack.c.b16 %v599, %v595
    %v852 = vpack.c.b16 %v600, %v596
    %v853 = vpack.c.b16 %v601, %v597
    %v854 = vpack.c.b16 %v606, %v602
    %v855 = vpack.c.b16 %v607, %v603
    %v856 = vpack.c.b16 %v608, %v604
    %v857 = vpack.c.b16 %v609, %v605
    %v858 = vpack.c.b16 %v614, %v610
    %v859 = vpack.c.b16 %v615, %v611
    %v860 = vpack.c.b16 %v616, %v612
    %v861 = vpack.c.b16 %v617, %v613
    %v862 = vpack.c.b16 %v622, %v618
    %v863 = vpack.c.b16 %v623, %v619
    %v864 = vpack.c.b16 %v624, %v620
    %v865 = vpack.c.b16 %v625, %v621
    %v866 = vpack.c.b16 %v630, %v626
    %v867 = vpack.c.b16 %v631, %v627
    %v868 = vpack.c.b16 %v632, %v628
    %v869 = vpack.c.b16 %v633, %v629
    %v870 = vpack.c.b16 %v638, %v634
    %v871 = vpack.c.b16 %v639, %v635
    %v872 = vpack.c.b16 %v640, %v636
    %v873 = vpack.c.b16 %v641, %v637
    %v874 = vpack.c.b16 %v646, %v642
    %v875 = vpack.c.b16 %v647, %v643
    %v876 = vpack.c.b16 %v648, %v644
    %v877 = vpack.c.b16 %v649, %v645
    %v878 = vpack.c.b16 %v654, %v650
    %v879 = vpack.c.b16 %v655, %v651
    %v880 = vpack.c.b16 %v656, %v652
    %v881 = vpack.c.b16 %v657, %v653
    %v882 = vpack.c.b16 %v662, %v658
    %v883 = vpack.c.b16 %v663, %v659
    %v884 = vpack.c.b16 %v664, %v660
    %v885 = vpack.c.b16 %v665, %v661
    %v886 = vpack.c.b16 %v670, %v666
    %v887 = vpack.c.b16 %v671, %v667
    %v888 = vpack.c.b16 %v672, %v668
    %v889 = vpack.c.b16 %v673, %v669
    %v890 = vpack.c.b16 %v678, %v674
    %v891 = vpack.c.b16 %v679, %v675
    %v892 = vpack.c.b16 %v680, %v676
    %v893 = vpack.c.b16 %v681, %v677
    %v894 = vpack.c.b16 %v686, %v682
    %v895 = vpack.c.b16 %v687, %v683
    %v896 = vpack.c.b16 %v688, %v684
    %v897 = vpack.c.b16 %v689, %v685
    %v898 = vpack.c.b16 %v694, %v690
    %v899 = vpack.c.b16 %v695, %v691
    %v900 = vpack.c.b16 %v696, %v692
    %v901 = vpack.c.b16 %v697, %v693
    %v902 = vpack.c.b16 %v702, %v698
    %v903 = vpack.c.b16 %v703, %v699
    %v904 = vpack.c.b16 %v704, %v700
    %v905 = vpack.c.b16 %v705, %v701
    %v906 = vpack.c.b16 %v710, %v706
    %v907 = vpack.c.b16 %v711, %v707
    %v908 = vpack.c.b16 %v712, %v708
    %v909 = vpack.c.b16 %v713, %v709
    %v910 = vpack.c.b16 %v718, %v714
    %v911 = vpack.c.b16 %v719, %v715
    %v912 = vpack.c.b16 %v720, %v716
    %v913 = vpack.c.b16 %v721, %v717
    %v914 = vpack.c.b16 %v726, %v722
    %v915 = vpack.c.b16 %v727, %v723
    %v916 = vpack.c.b16 %v728, %v724
    %v917 = vpack.c.b16 %v729, %v725
    %v918 = vpack.c.b16 %v734, %v730
    %v919 = vpack.c.b16 %v735, %v731
    %v920 = vpack.c.b16 %v736, %v732
    %v921 = vpack.c.b16 %v737, %v733
    %v922 = vpack.c.b16 %v742, %v738
    %v923 = vpack.c.b16 %v743, %v739
    %v924 = vpack.c.b16 %v744, %v740
    %v925 = vpack.c.b16 %v745, %v741
    %v926 = vpack.c.b16 %v750, %v746
    %v927 = vpack.c.b16 %v751, %v747
    %v928 = vpack.c.b16 %v752, %v748
    %v929 = vpack.c.b16 %v753, %v749
    %v930 = vpack.c.b16 %v758, %v754
    %v931 = vpack.c.b16 %v759, %v755
    %v932 = vpack.c.b16 %v760, %v756
    %v933 = vpack.c.b16 %v761, %v757
    %v934 = vpack.c.b16 %v766, %v762
    %v935 = vpack.c.b16 %v767, %v763
    %v936 = vpack.c.b16 %v768, %v764
    %v937 = vpack.c.b16 %v769, %v765
    %v938 = vpack.c.b16 %v774, %v770
    %v939 = vpack.c.b16 %v775, %v771
    %v940 = vpack.c.b16 %v776, %v772
    %v941 = vpack.c.b16 %v777, %v773
    %v942 = vpack.c.b16 %v782, %v778
    %v943 = vpack.c.b16 %v783, %v779
    %v944 = vpack.c.b16 %v784, %v780
    %v945 = vpack.c.b16 %v785, %v781
    %v946 = vpack.c.b16 %v790, %v786
    %v947 = vpack.c.b16 %v791, %v787
    %v948 = vpack.c.b16 %v792, %v788
    %v949 = vpack.c.b16 %v793, %v789
    %v950 = vpack.c.b16 %v798, %v794
    %v951 = vpack.c.b16 %v799, %v795
    %v952 = vpack.c.b16 %v800, %v796
    %v953 = vpack.c.b16 %v801, %v797
    %v954 = vpack.c.b16 %v806, %v802
    %v955 = vpack.c.b16 %v807, %v803
    %v956 = vpack.c.b16 %v808, %v804
    %v957 = vpack.c.b16 %v809, %v805
    %v958 = vpack.c.b16 %v814, %v810
    %v959 = vpack.c.b16 %v815, %v811
    %v960 = vpack.c.b16 %v816, %v812
    %v961 = vpack.c.b16 %v817, %v813
    %v962 = vpack.c.b16 %v822, %v818
    %v963 = vpack.c.b16 %v823, %v819
    %v964 = vpack.c.b16 %v824, %v820
    %v965 = vpack.c.b16 %v825, %v821
    %v966 = vpack.c.b16 %v830, %v826
    %v967 = vpack.c.b16 %v831, %v827
    %v968 = vpack.c.b16 %v832, %v828
    %v969 = vpack.c.b16 %v833, %v829
    %v970 = vpack.c.b16 %v838, %v834
    %v971 = vpack.c.b16 %v839, %v835
    %v972 = vpack.c.b16 %v840, %v836
    %v973 = vpack.c.b16 %v841, %v837
    %v974 = vpack.c.b16 %v846, %v842
    %v975 = vpack.c.b16 %v847, %v843
    %v976 = vpack.c.b16 %v848, %v844
    %v977 = vpack.c.b16 %v849, %v845
    %1106 = vmatprep.subr.bf16.mxu0 %v879
    %1107 = vmatpush1.bf16.msra.mxu0 %v878
    %1108 = vmatprep.subr.bf16.mxu0 %v875
    %1109 = vmatpush1.bf16.msra.mxu0 %v874
    %1110 = vmatprep.subr.bf16.mxu0 %v871
    %1111 = vmatpush1.bf16.msra.mxu0 %v870
    %1112 = vmatprep.subr.bf16.mxu0 %v867
    %1113 = vmatpush1.bf16.msra.mxu0 %v866
    %1114 = vmatprep.subr.bf16.mxu0 %v863
    %1115 = vmatpush1.bf16.msra.mxu0 %v862
    %1116 = vmatprep.subr.bf16.mxu0 %v859
    %1117 = vmatpush1.bf16.msra.mxu0 %v858
    %1118 = vmatprep.subr.bf16.mxu0 %v855
    %1119 = vmatpush1.bf16.msra.mxu0 %v854
    %1120 = vmatprep.subr.bf16.mxu0 %v851
    %1121 = vmatpush1.bf16.msra.mxu0 %v850
    %1122 = vmatprep.subr.bf16.mxu0 %v911
    %1123 = vmatpush2.bf16.msra.mxu0 %v910
    %1124 = vmatprep.subr.bf16.mxu0 %v907
    %1125 = vmatpush2.bf16.msra.mxu0 %v906
    %1126 = vmatprep.subr.bf16.mxu0 %v903
    %1127 = vmatpush2.bf16.msra.mxu0 %v902
    %1128 = vmatprep.subr.bf16.mxu0 %v899
    %1129 = vmatpush2.bf16.msra.mxu0 %v898
    %1130 = vmatprep.subr.bf16.mxu0 %v895
    %1131 = vmatpush2.bf16.msra.mxu0 %v894
    %1132 = vmatprep.subr.bf16.mxu0 %v891
    %1133 = vmatpush2.bf16.msra.mxu0 %v890
    %1134 = vmatprep.subr.bf16.mxu0 %v887
    %1135 = vmatpush2.bf16.msra.mxu0 %v886
    %1136 = vmatprep.subr.bf16.mxu0 %v883
    %1137 = vmatpush2.bf16.msra.mxu0 %v882
    %1138 = vmatprep.mubr.bf16.mxu0 %v308
    %1139 = vmatmul.mubr.bf16.gmra.mxu0 %v307
    %v1140 = vpop.f32.mrf.mxu0
    %v1141 = vadd.f32 %v449, %v1140
    %v1142 = vpop.f32.mrf.mxu0
    %v1143 = vadd.f32 %v453, %v1142
    %v1144 = vpop.f32.mrf.mxu0
    %v1145 = vpop.f32.mrf.mxu0
    %1146 = vdwg.mxu0
    %1147 = vmatprep.subr.bf16.mxu0 %v943
    %1148 = vmatpush1.bf16.msra.mxu0 %v942
    %1149 = vmatprep.subr.bf16.mxu0 %v939
    %1150 = vmatpush1.bf16.msra.mxu0 %v938
    %1151 = vmatprep.subr.bf16.mxu0 %v935
    %1152 = vmatpush1.bf16.msra.mxu0 %v934
    %1153 = vmatprep.subr.bf16.mxu0 %v931
    %1154 = vmatpush1.bf16.msra.mxu0 %v930
    %1155 = vmatprep.subr.bf16.mxu0 %v927
    %1156 = vmatpush1.bf16.msra.mxu0 %v926
    %1157 = vmatprep.subr.bf16.mxu0 %v923
    %1158 = vmatpush1.bf16.msra.mxu0 %v922
    %1159 = vmatprep.subr.bf16.mxu0 %v919
    %1160 = vmatpush1.bf16.msra.mxu0 %v918
    %1161 = vmatprep.subr.bf16.mxu0 %v915
    %1162 = vmatpush1.bf16.msra.mxu0 %v914
    %1163 = vmatprep.subr.bf16.mxu0 %v975
    %1164 = vmatpush2.bf16.msra.mxu0 %v974
    %1165 = vmatprep.subr.bf16.mxu0 %v971
    %1166 = vmatpush2.bf16.msra.mxu0 %v970
    %1167 = vmatprep.subr.bf16.mxu0 %v967
    %1168 = vmatpush2.bf16.msra.mxu0 %v966
    %1169 = vmatprep.subr.bf16.mxu0 %v963
    %1170 = vmatpush2.bf16.msra.mxu0 %v962
    %1171 = vmatprep.subr.bf16.mxu0 %v959
    %1172 = vmatpush2.bf16.msra.mxu0 %v958
    %1173 = vmatprep.subr.bf16.mxu0 %v955
    %1174 = vmatpush2.bf16.msra.mxu0 %v954
    %1175 = vmatprep.subr.bf16.mxu0 %v951
    %1176 = vmatpush2.bf16.msra.mxu0 %v950
    %1177 = vmatprep.subr.bf16.mxu0 %v947
    %1178 = vmatpush2.bf16.msra.mxu0 %v946
    %1179 = vmatprep.mubr.bf16.mxu0 %v310
    %1180 = vmatmul.mubr.bf16.gmra.mxu0 %v309
    %v1181 = vpop.f32.mrf.mxu0
    %v1182 = vadd.f32 %v1141, %v1181
    %v1183 = vpop.f32.mrf.mxu0
    %v1184 = vadd.f32 %v1143, %v1183
    %v1185 = vpop.f32.mrf.mxu0
    %v1186 = vpop.f32.mrf.mxu0
    %1187 = vdwg.mxu0
    %1188 = vmatprep.subr.bf16.mxu0 %v881
    %1189 = vmatpush1.bf16.msra.mxu0 %v880
    %1190 = vmatprep.subr.bf16.mxu0 %v877
    %1191 = vmatpush1.bf16.msra.mxu0 %v876
    %1192 = vmatprep.subr.bf16.mxu0 %v873
    %1193 = vmatpush1.bf16.msra.mxu0 %v872
    %1194 = vmatprep.subr.bf16.mxu0 %v869
    %1195 = vmatpush1.bf16.msra.mxu0 %v868
    %1196 = vmatprep.subr.bf16.mxu0 %v865
    %1197 = vmatpush1.bf16.msra.mxu0 %v864
    %1198 = vmatprep.subr.bf16.mxu0 %v861
    %1199 = vmatpush1.bf16.msra.mxu0 %v860
    %1200 = vmatprep.subr.bf16.mxu0 %v857
    %1201 = vmatpush1.bf16.msra.mxu0 %v856
    %1202 = vmatprep.subr.bf16.mxu0 %v853
    %1203 = vmatpush1.bf16.msra.mxu0 %v852
    %1204 = vmatprep.subr.bf16.mxu0 %v913
    %1205 = vmatpush2.bf16.msra.mxu0 %v912
    %1206 = vmatprep.subr.bf16.mxu0 %v909
    %1207 = vmatpush2.bf16.msra.mxu0 %v908
    %1208 = vmatprep.subr.bf16.mxu0 %v905
    %1209 = vmatpush2.bf16.msra.mxu0 %v904
    %1210 = vmatprep.subr.bf16.mxu0 %v901
    %1211 = vmatpush2.bf16.msra.mxu0 %v900
    %1212 = vmatprep.subr.bf16.mxu0 %v897
    %1213 = vmatpush2.bf16.msra.mxu0 %v896
    %1214 = vmatprep.subr.bf16.mxu0 %v893
    %1215 = vmatpush2.bf16.msra.mxu0 %v892
    %1216 = vmatprep.subr.bf16.mxu0 %v889
    %1217 = vmatpush2.bf16.msra.mxu0 %v888
    %1218 = vmatprep.subr.bf16.mxu0 %v885
    %1219 = vmatpush2.bf16.msra.mxu0 %v884
    %1220 = vmatprep.mubr.bf16.mxu0 %v308
    %1221 = vmatmul.mubr.bf16.gmra.mxu0 %v307
    %v1222 = vpop.f32.mrf.mxu0
    %v1223 = vadd.f32 %v457, %v1222
    %v1224 = vpop.f32.mrf.mxu0
    %v1225 = vadd.f32 %v461, %v1224
    %v1226 = vpop.f32.mrf.mxu0
    %v1227 = vpop.f32.mrf.mxu0
    %1228 = vdwg.mxu0
    %1229 = vmatprep.subr.bf16.mxu0 %v945
    %1230 = vmatpush1.bf16.msra.mxu0 %v944
    %1231 = vmatprep.subr.bf16.mxu0 %v941
    %1232 = vmatpush1.bf16.msra.mxu0 %v940
    %1233 = vmatprep.subr.bf16.mxu0 %v937
    %1234 = vmatpush1.bf16.msra.mxu0 %v936
    %1235 = vmatprep.subr.bf16.mxu0 %v933
    %1236 = vmatpush1.bf16.msra.mxu0 %v932
    %1237 = vmatprep.subr.bf16.mxu0 %v929
    %1238 = vmatpush1.bf16.msra.mxu0 %v928
    %1239 = vmatprep.subr.bf16.mxu0 %v925
    %1240 = vmatpush1.bf16.msra.mxu0 %v924
    %1241 = vmatprep.subr.bf16.mxu0 %v921
    %1242 = vmatpush1.bf16.msra.mxu0 %v920
    %1243 = vmatprep.subr.bf16.mxu0 %v917
    %1244 = vmatpush1.bf16.msra.mxu0 %v916
    %1245 = vmatprep.subr.bf16.mxu0 %v977
    %1246 = vmatpush2.bf16.msra.mxu0 %v976
    %1247 = vmatprep.subr.bf16.mxu0 %v973
    %1248 = vmatpush2.bf16.msra.mxu0 %v972
    %1249 = vmatprep.subr.bf16.mxu0 %v969
    %1250 = vmatpush2.bf16.msra.mxu0 %v968
    %1251 = vmatprep.subr.bf16.mxu0 %v965
    %1252 = vmatpush2.bf16.msra.mxu0 %v964
    %1253 = vmatprep.subr.bf16.mxu0 %v961
    %1254 = vmatpush2.bf16.msra.mxu0 %v960
    %1255 = vmatprep.subr.bf16.mxu0 %v957
    %1256 = vmatpush2.bf16.msra.mxu0 %v956
    %1257 = vmatprep.subr.bf16.mxu0 %v953
    %1258 = vmatpush2.bf16.msra.mxu0 %v952
    %1259 = vmatprep.subr.bf16.mxu0 %v949
    %1260 = vmatpush2.bf16.msra.mxu0 %v948
    %1261 = vmatprep.mubr.bf16.mxu0 %v310
    %1262 = vmatmul.mubr.bf16.gmra.mxu0 %v309
    %v1263 = vpop.f32.mrf.mxu0
    %v1264 = vadd.f32 %v1223, %v1263
    %v1265 = vpop.f32.mrf.mxu0
    %v1266 = vadd.f32 %v1225, %v1265
    %v1267 = vpop.f32.mrf.mxu0
    %v1268 = vpop.f32.mrf.mxu0
    %1269 = vdwg.mxu0
    %v1270 = vmax.f32 %v1182, 0.0
    %v1271 = vmax.f32 %v1184, 0.0
    %v1272 = vmax.f32 %v1264, 0.0
    %v1273 = vmax.f32 %v1266, 0.0
    %v1274 = vpack.c.bf16 %v1270, %v1270
    %v1275 = vpack.c.bf16 %v1271, %v1271
    %v1276 = vpack.c.bf16 %v1272, %v1272
    %v1277 = vpack.c.bf16 %v1273, %v1273
    %v1278 = vld [vmem:[#allocation2 + $0x10] sm:$0xff]
    %v1279 = vld [vmem:[#allocation2 + $0x18] sm:$0xff]
    %v1280 = vld [vmem:[#allocation2 + $0x30] sm:$0xff]
    %v1281 = vld [vmem:[#allocation2 + $0x38] sm:$0xff]
    %v1282 = vld [vmem:[#allocation2 + $0x50] sm:$0xff]
    %v1283 = vld [vmem:[#allocation2 + $0x58] sm:$0xff]
    %v1284 = vld [vmem:[#allocation2 + $0x70] sm:$0xff]
    %v1285 = vld [vmem:[#allocation2 + $0x78] sm:$0xff]
    %v1286 = vld [vmem:[#allocation2 + $0x90] sm:$0xff]
    %v1287 = vld [vmem:[#allocation2 + $0x98] sm:$0xff]
    %v1288 = vld [vmem:[#allocation2 + $0xb0] sm:$0xff]
    %v1289 = vld [vmem:[#allocation2 + $0xb8] sm:$0xff]
    %v1290 = vld [vmem:[#allocation2 + $0xd0] sm:$0xff]
    %v1291 = vld [vmem:[#allocation2 + $0xd8] sm:$0xff]
    %v1292 = vld [vmem:[#allocation2 + $0xf0] sm:$0xff]
    %v1293 = vld [vmem:[#allocation2 + $0xf8] sm:$0xff]
    %v1294 = vld [vmem:[#allocation2 + $0x110] sm:$0xff]
    %v1295 = vld [vmem:[#allocation2 + $0x118] sm:$0xff]
    %v1296 = vld [vmem:[#allocation2 + $0x130] sm:$0xff]
    %v1297 = vld [vmem:[#allocation2 + $0x138] sm:$0xff]
    %v1298 = vld [vmem:[#allocation2 + $0x150] sm:$0xff]
    %v1299 = vld [vmem:[#allocation2 + $0x158] sm:$0xff]
    %v1300 = vld [vmem:[#allocation2 + $0x170] sm:$0xff]
    %v1301 = vld [vmem:[#allocation2 + $0x178] sm:$0xff]
    %v1302 = vld [vmem:[#allocation2 + $0x190] sm:$0xff]
    %v1303 = vld [vmem:[#allocation2 + $0x198] sm:$0xff]
    %v1304 = vld [vmem:[#allocation2 + $0x1b0] sm:$0xff]
    %v1305 = vld [vmem:[#allocation2 + $0x1b8] sm:$0xff]
    %v1306 = vld [vmem:[#allocation2 + $0x1d0] sm:$0xff]
    %v1307 = vld [vmem:[#allocation2 + $0x1d8] sm:$0xff]
    %v1308 = vld [vmem:[#allocation2 + $0x1f0] sm:$0xff]
    %v1309 = vld [vmem:[#allocation2 + $0x1f8] sm:$0xff]
    %v1310 = vld [vmem:[#allocation2 + $0x210] sm:$0xff]
    %v1311 = vld [vmem:[#allocation2 + $0x218] sm:$0xff]
    %v1312 = vld [vmem:[#allocation2 + $0x230] sm:$0xff]
    %v1313 = vld [vmem:[#allocation2 + $0x238] sm:$0xff]
    %v1314 = vld [vmem:[#allocation2 + $0x250] sm:$0xff]
    %v1315 = vld [vmem:[#allocation2 + $0x258] sm:$0xff]
    %v1316 = vld [vmem:[#allocation2 + $0x270] sm:$0xff]
    %v1317 = vld [vmem:[#allocation2 + $0x278] sm:$0xff]
    %v1318 = vld [vmem:[#allocation2 + $0x290] sm:$0xff]
    %v1319 = vld [vmem:[#allocation2 + $0x298] sm:$0xff]
    %v1320 = vld [vmem:[#allocation2 + $0x2b0] sm:$0xff]
    %v1321 = vld [vmem:[#allocation2 + $0x2b8] sm:$0xff]
    %v1322 = vld [vmem:[#allocation2 + $0x2d0] sm:$0xff]
    %v1323 = vld [vmem:[#allocation2 + $0x2d8] sm:$0xff]
    %v1324 = vld [vmem:[#allocation2 + $0x2f0] sm:$0xff]
    %v1325 = vld [vmem:[#allocation2 + $0x2f8] sm:$0xff]
    %v1326 = vld [vmem:[#allocation2 + $0x310] sm:$0xff]
    %v1327 = vld [vmem:[#allocation2 + $0x318] sm:$0xff]
    %v1328 = vld [vmem:[#allocation2 + $0x330] sm:$0xff]
    %v1329 = vld [vmem:[#allocation2 + $0x338] sm:$0xff]
    %v1330 = vld [vmem:[#allocation2 + $0x350] sm:$0xff]
    %v1331 = vld [vmem:[#allocation2 + $0x358] sm:$0xff]
    %v1332 = vld [vmem:[#allocation2 + $0x370] sm:$0xff]
    %v1333 = vld [vmem:[#allocation2 + $0x378] sm:$0xff]
    %v1334 = vld [vmem:[#allocation2 + $0x390] sm:$0xff]
    %v1335 = vld [vmem:[#allocation2 + $0x398] sm:$0xff]
    %v1336 = vld [vmem:[#allocation2 + $0x3b0] sm:$0xff]
    %v1337 = vld [vmem:[#allocation2 + $0x3b8] sm:$0xff]
    %v1338 = vld [vmem:[#allocation2 + $0x3d0] sm:$0xff]
    %v1339 = vld [vmem:[#allocation2 + $0x3d8] sm:$0xff]
    %v1340 = vld [vmem:[#allocation2 + $0x3f0] sm:$0xff]
    %v1341 = vld [vmem:[#allocation2 + $0x3f8] sm:$0xff]
    %v1342 = vld [vmem:[#allocation2 + $0x410] sm:$0xff]
    %v1343 = vld [vmem:[#allocation2 + $0x418] sm:$0xff]
    %v1344 = vld [vmem:[#allocation2 + $0x430] sm:$0xff]
    %v1345 = vld [vmem:[#allocation2 + $0x438] sm:$0xff]
    %v1346 = vld [vmem:[#allocation2 + $0x450] sm:$0xff]
    %v1347 = vld [vmem:[#allocation2 + $0x458] sm:$0xff]
    %v1348 = vld [vmem:[#allocation2 + $0x470] sm:$0xff]
    %v1349 = vld [vmem:[#allocation2 + $0x478] sm:$0xff]
    %v1350 = vld [vmem:[#allocation2 + $0x490] sm:$0xff]
    %v1351 = vld [vmem:[#allocation2 + $0x498] sm:$0xff]
    %v1352 = vld [vmem:[#allocation2 + $0x4b0] sm:$0xff]
    %v1353 = vld [vmem:[#allocation2 + $0x4b8] sm:$0xff]
    %v1354 = vld [vmem:[#allocation2 + $0x4d0] sm:$0xff]
    %v1355 = vld [vmem:[#allocation2 + $0x4d8] sm:$0xff]
    %v1356 = vld [vmem:[#allocation2 + $0x4f0] sm:$0xff]
    %v1357 = vld [vmem:[#allocation2 + $0x4f8] sm:$0xff]
    %v1358 = vld [vmem:[#allocation2 + $0x510] sm:$0xff]
    %v1359 = vld [vmem:[#allocation2 + $0x518] sm:$0xff]
    %v1360 = vld [vmem:[#allocation2 + $0x530] sm:$0xff]
    %v1361 = vld [vmem:[#allocation2 + $0x538] sm:$0xff]
    %v1362 = vld [vmem:[#allocation2 + $0x550] sm:$0xff]
    %v1363 = vld [vmem:[#allocation2 + $0x558] sm:$0xff]
    %v1364 = vld [vmem:[#allocation2 + $0x570] sm:$0xff]
    %v1365 = vld [vmem:[#allocation2 + $0x578] sm:$0xff]
    %v1366 = vld [vmem:[#allocation2 + $0x590] sm:$0xff]
    %v1367 = vld [vmem:[#allocation2 + $0x598] sm:$0xff]
    %v1368 = vld [vmem:[#allocation2 + $0x5b0] sm:$0xff]
    %v1369 = vld [vmem:[#allocation2 + $0x5b8] sm:$0xff]
    %v1370 = vld [vmem:[#allocation2 + $0x5d0] sm:$0xff]
    %v1371 = vld [vmem:[#allocation2 + $0x5d8] sm:$0xff]
    %v1372 = vld [vmem:[#allocation2 + $0x5f0] sm:$0xff]
    %v1373 = vld [vmem:[#allocation2 + $0x5f8] sm:$0xff]
    %v1374 = vld [vmem:[#allocation2 + $0x610] sm:$0xff]
    %v1375 = vld [vmem:[#allocation2 + $0x618] sm:$0xff]
    %v1376 = vld [vmem:[#allocation2 + $0x630] sm:$0xff]
    %v1377 = vld [vmem:[#allocation2 + $0x638] sm:$0xff]
    %v1378 = vld [vmem:[#allocation2 + $0x650] sm:$0xff]
    %v1379 = vld [vmem:[#allocation2 + $0x658] sm:$0xff]
    %v1380 = vld [vmem:[#allocation2 + $0x670] sm:$0xff]
    %v1381 = vld [vmem:[#allocation2 + $0x678] sm:$0xff]
    %v1382 = vld [vmem:[#allocation2 + $0x690] sm:$0xff]
    %v1383 = vld [vmem:[#allocation2 + $0x698] sm:$0xff]
    %v1384 = vld [vmem:[#allocation2 + $0x6b0] sm:$0xff]
    %v1385 = vld [vmem:[#allocation2 + $0x6b8] sm:$0xff]
    %v1386 = vld [vmem:[#allocation2 + $0x6d0] sm:$0xff]
    %v1387 = vld [vmem:[#allocation2 + $0x6d8] sm:$0xff]
    %v1388 = vld [vmem:[#allocation2 + $0x6f0] sm:$0xff]
    %v1389 = vld [vmem:[#allocation2 + $0x6f8] sm:$0xff]
    %v1390 = vld [vmem:[#allocation2 + $0x710] sm:$0xff]
    %v1391 = vld [vmem:[#allocation2 + $0x718] sm:$0xff]
    %v1392 = vld [vmem:[#allocation2 + $0x730] sm:$0xff]
    %v1393 = vld [vmem:[#allocation2 + $0x738] sm:$0xff]
    %v1394 = vld [vmem:[#allocation2 + $0x750] sm:$0xff]
    %v1395 = vld [vmem:[#allocation2 + $0x758] sm:$0xff]
    %v1396 = vld [vmem:[#allocation2 + $0x770] sm:$0xff]
    %v1397 = vld [vmem:[#allocation2 + $0x778] sm:$0xff]
    %v1398 = vld [vmem:[#allocation2 + $0x790] sm:$0xff]
    %v1399 = vld [vmem:[#allocation2 + $0x798] sm:$0xff]
    %v1400 = vld [vmem:[#allocation2 + $0x7b0] sm:$0xff]
    %v1401 = vld [vmem:[#allocation2 + $0x7b8] sm:$0xff]
    %v1402 = vld [vmem:[#allocation2 + $0x7d0] sm:$0xff]
    %v1403 = vld [vmem:[#allocation2 + $0x7d8] sm:$0xff]
    %v1404 = vld [vmem:[#allocation2 + $0x7f0] sm:$0xff]
    %v1405 = vld [vmem:[#allocation2 + $0x7f8] sm:$0xff]
    %s1406 = scalar_lea.vmem %s4, 9
    %v1407 = vld [vmem:[%s1406] ss:$2 sm:$0xf]
    %v1409 = vlaneseq
    %v1410 = vshrl.u32 %v1409, 7
    %v1411 = vsub.s32 0, %v1410
    %v1412 = vrot.slane %v1407, %v1411
    %v1413 = vlaneseq
    %v1414 = vshrl.u32 %v1413, 7
    %v1415 = vsub.s32 1, %v1414
    %v1416 = vrot.slane %v1407, %v1415
    %v1417 = vlaneseq
    %v1418 = vshrl.u32 %v1417, 7
    %v1419 = vsub.s32 2, %v1418
    %v1420 = vrot.slane %v1407, %v1419
    %v1421 = vlaneseq
    %v1422 = vshrl.u32 %v1421, 7
    %v1423 = vsub.s32 3, %v1422
    %v1424 = vrot.slane %v1407, %v1423
    %v1557 = vunpack.c.l.b16 %v1278
    %v1558 = vunpack.c.h.b16 %v1278
    %v1559 = vunpack.c.l.b16 %v1279
    %v1560 = vunpack.c.h.b16 %v1279
    %v1561 = vunpack.c.l.b16 %v1280
    %v1562 = vunpack.c.h.b16 %v1280
    %v1563 = vunpack.c.l.b16 %v1281
    %v1564 = vunpack.c.h.b16 %v1281
    %v1565 = vunpack.c.l.b16 %v1282
    %v1566 = vunpack.c.h.b16 %v1282
    %v1567 = vunpack.c.l.b16 %v1283
    %v1568 = vunpack.c.h.b16 %v1283
    %v1569 = vunpack.c.l.b16 %v1284
    %v1570 = vunpack.c.h.b16 %v1284
    %v1571 = vunpack.c.l.b16 %v1285
    %v1572 = vunpack.c.h.b16 %v1285
    %v1573 = vunpack.c.l.b16 %v1286
    %v1574 = vunpack.c.h.b16 %v1286
    %v1575 = vunpack.c.l.b16 %v1287
    %v1576 = vunpack.c.h.b16 %v1287
    %v1577 = vunpack.c.l.b16 %v1288
    %v1578 = vunpack.c.h.b16 %v1288
    %v1579 = vunpack.c.l.b16 %v1289
    %v1580 = vunpack.c.h.b16 %v1289
    %v1581 = vunpack.c.l.b16 %v1290
    %v1582 = vunpack.c.h.b16 %v1290
    %v1583 = vunpack.c.l.b16 %v1291
    %v1584 = vunpack.c.h.b16 %v1291
    %v1585 = vunpack.c.l.b16 %v1292
    %v1586 = vunpack.c.h.b16 %v1292
    %v1587 = vunpack.c.l.b16 %v1293
    %v1588 = vunpack.c.h.b16 %v1293
    %v1589 = vunpack.c.l.b16 %v1294
    %v1590 = vunpack.c.h.b16 %v1294
    %v1591 = vunpack.c.l.b16 %v1295
    %v1592 = vunpack.c.h.b16 %v1295
    %v1593 = vunpack.c.l.b16 %v1296
    %v1594 = vunpack.c.h.b16 %v1296
    %v1595 = vunpack.c.l.b16 %v1297
    %v1596 = vunpack.c.h.b16 %v1297
    %v1597 = vunpack.c.l.b16 %v1298
    %v1598 = vunpack.c.h.b16 %v1298
    %v1599 = vunpack.c.l.b16 %v1299
    %v1600 = vunpack.c.h.b16 %v1299
    %v1601 = vunpack.c.l.b16 %v1300
    %v1602 = vunpack.c.h.b16 %v1300
    %v1603 = vunpack.c.l.b16 %v1301
    %v1604 = vunpack.c.h.b16 %v1301
    %v1605 = vunpack.c.l.b16 %v1302
    %v1606 = vunpack.c.h.b16 %v1302
    %v1607 = vunpack.c.l.b16 %v1303
    %v1608 = vunpack.c.h.b16 %v1303
    %v1609 = vunpack.c.l.b16 %v1304
    %v1610 = vunpack.c.h.b16 %v1304
    %v1611 = vunpack.c.l.b16 %v1305
    %v1612 = vunpack.c.h.b16 %v1305
    %v1613 = vunpack.c.l.b16 %v1306
    %v1614 = vunpack.c.h.b16 %v1306
    %v1615 = vunpack.c.l.b16 %v1307
    %v1616 = vunpack.c.h.b16 %v1307
    %v1617 = vunpack.c.l.b16 %v1308
    %v1618 = vunpack.c.h.b16 %v1308
    %v1619 = vunpack.c.l.b16 %v1309
    %v1620 = vunpack.c.h.b16 %v1309
    %v1621 = vunpack.c.l.b16 %v1310
    %v1622 = vunpack.c.h.b16 %v1310
    %v1623 = vunpack.c.l.b16 %v1311
    %v1624 = vunpack.c.h.b16 %v1311
    %v1625 = vunpack.c.l.b16 %v1312
    %v1626 = vunpack.c.h.b16 %v1312
    %v1627 = vunpack.c.l.b16 %v1313
    %v1628 = vunpack.c.h.b16 %v1313
    %v1629 = vunpack.c.l.b16 %v1314
    %v1630 = vunpack.c.h.b16 %v1314
    %v1631 = vunpack.c.l.b16 %v1315
    %v1632 = vunpack.c.h.b16 %v1315
    %v1633 = vunpack.c.l.b16 %v1316
    %v1634 = vunpack.c.h.b16 %v1316
    %v1635 = vunpack.c.l.b16 %v1317
    %v1636 = vunpack.c.h.b16 %v1317
    %v1637 = vunpack.c.l.b16 %v1318
    %v1638 = vunpack.c.h.b16 %v1318
    %v1639 = vunpack.c.l.b16 %v1319
    %v1640 = vunpack.c.h.b16 %v1319
    %v1641 = vunpack.c.l.b16 %v1320
    %v1642 = vunpack.c.h.b16 %v1320
    %v1643 = vunpack.c.l.b16 %v1321
    %v1644 = vunpack.c.h.b16 %v1321
    %v1645 = vunpack.c.l.b16 %v1322
    %v1646 = vunpack.c.h.b16 %v1322
    %v1647 = vunpack.c.l.b16 %v1323
    %v1648 = vunpack.c.h.b16 %v1323
    %v1649 = vunpack.c.l.b16 %v1324
    %v1650 = vunpack.c.h.b16 %v1324
    %v1651 = vunpack.c.l.b16 %v1325
    %v1652 = vunpack.c.h.b16 %v1325
    %v1653 = vunpack.c.l.b16 %v1326
    %v1654 = vunpack.c.h.b16 %v1326
    %v1655 = vunpack.c.l.b16 %v1327
    %v1656 = vunpack.c.h.b16 %v1327
    %v1657 = vunpack.c.l.b16 %v1328
    %v1658 = vunpack.c.h.b16 %v1328
    %v1659 = vunpack.c.l.b16 %v1329
    %v1660 = vunpack.c.h.b16 %v1329
    %v1661 = vunpack.c.l.b16 %v1330
    %v1662 = vunpack.c.h.b16 %v1330
    %v1663 = vunpack.c.l.b16 %v1331
    %v1664 = vunpack.c.h.b16 %v1331
    %v1665 = vunpack.c.l.b16 %v1332
    %v1666 = vunpack.c.h.b16 %v1332
    %v1667 = vunpack.c.l.b16 %v1333
    %v1668 = vunpack.c.h.b16 %v1333
    %v1669 = vunpack.c.l.b16 %v1334
    %v1670 = vunpack.c.h.b16 %v1334
    %v1671 = vunpack.c.l.b16 %v1335
    %v1672 = vunpack.c.h.b16 %v1335
    %v1673 = vunpack.c.l.b16 %v1336
    %v1674 = vunpack.c.h.b16 %v1336
    %v1675 = vunpack.c.l.b16 %v1337
    %v1676 = vunpack.c.h.b16 %v1337
    %v1677 = vunpack.c.l.b16 %v1338
    %v1678 = vunpack.c.h.b16 %v1338
    %v1679 = vunpack.c.l.b16 %v1339
    %v1680 = vunpack.c.h.b16 %v1339
    %v1681 = vunpack.c.l.b16 %v1340
    %v1682 = vunpack.c.h.b16 %v1340
    %v1683 = vunpack.c.l.b16 %v1341
    %v1684 = vunpack.c.h.b16 %v1341
    %v1685 = vunpack.c.l.b16 %v1342
    %v1686 = vunpack.c.h.b16 %v1342
    %v1687 = vunpack.c.l.b16 %v1343
    %v1688 = vunpack.c.h.b16 %v1343
    %v1689 = vunpack.c.l.b16 %v1344
    %v1690 = vunpack.c.h.b16 %v1344
    %v1691 = vunpack.c.l.b16 %v1345
    %v1692 = vunpack.c.h.b16 %v1345
    %v1693 = vunpack.c.l.b16 %v1346
    %v1694 = vunpack.c.h.b16 %v1346
    %v1695 = vunpack.c.l.b16 %v1347
    %v1696 = vunpack.c.h.b16 %v1347
    %v1697 = vunpack.c.l.b16 %v1348
    %v1698 = vunpack.c.h.b16 %v1348
    %v1699 = vunpack.c.l.b16 %v1349
    %v1700 = vunpack.c.h.b16 %v1349
    %v1701 = vunpack.c.l.b16 %v1350
    %v1702 = vunpack.c.h.b16 %v1350
    %v1703 = vunpack.c.l.b16 %v1351
    %v1704 = vunpack.c.h.b16 %v1351
    %v1705 = vunpack.c.l.b16 %v1352
    %v1706 = vunpack.c.h.b16 %v1352
    %v1707 = vunpack.c.l.b16 %v1353
    %v1708 = vunpack.c.h.b16 %v1353
    %v1709 = vunpack.c.l.b16 %v1354
    %v1710 = vunpack.c.h.b16 %v1354
    %v1711 = vunpack.c.l.b16 %v1355
    %v1712 = vunpack.c.h.b16 %v1355
    %v1713 = vunpack.c.l.b16 %v1356
    %v1714 = vunpack.c.h.b16 %v1356
    %v1715 = vunpack.c.l.b16 %v1357
    %v1716 = vunpack.c.h.b16 %v1357
    %v1717 = vunpack.c.l.b16 %v1358
    %v1718 = vunpack.c.h.b16 %v1358
    %v1719 = vunpack.c.l.b16 %v1359
    %v1720 = vunpack.c.h.b16 %v1359
    %v1721 = vunpack.c.l.b16 %v1360
    %v1722 = vunpack.c.h.b16 %v1360
    %v1723 = vunpack.c.l.b16 %v1361
    %v1724 = vunpack.c.h.b16 %v1361
    %v1725 = vunpack.c.l.b16 %v1362
    %v1726 = vunpack.c.h.b16 %v1362
    %v1727 = vunpack.c.l.b16 %v1363
    %v1728 = vunpack.c.h.b16 %v1363
    %v1729 = vunpack.c.l.b16 %v1364
    %v1730 = vunpack.c.h.b16 %v1364
    %v1731 = vunpack.c.l.b16 %v1365
    %v1732 = vunpack.c.h.b16 %v1365
    %v1733 = vunpack.c.l.b16 %v1366
    %v1734 = vunpack.c.h.b16 %v1366
    %v1735 = vunpack.c.l.b16 %v1367
    %v1736 = vunpack.c.h.b16 %v1367
    %v1737 = vunpack.c.l.b16 %v1368
    %v1738 = vunpack.c.h.b16 %v1368
    %v1739 = vunpack.c.l.b16 %v1369
    %v1740 = vunpack.c.h.b16 %v1369
    %v1741 = vunpack.c.l.b16 %v1370
    %v1742 = vunpack.c.h.b16 %v1370
    %v1743 = vunpack.c.l.b16 %v1371
    %v1744 = vunpack.c.h.b16 %v1371
    %v1745 = vunpack.c.l.b16 %v1372
    %v1746 = vunpack.c.h.b16 %v1372
    %v1747 = vunpack.c.l.b16 %v1373
    %v1748 = vunpack.c.h.b16 %v1373
    %v1749 = vunpack.c.l.b16 %v1374
    %v1750 = vunpack.c.h.b16 %v1374
    %v1751 = vunpack.c.l.b16 %v1375
    %v1752 = vunpack.c.h.b16 %v1375
    %v1753 = vunpack.c.l.b16 %v1376
    %v1754 = vunpack.c.h.b16 %v1376
    %v1755 = vunpack.c.l.b16 %v1377
    %v1756 = vunpack.c.h.b16 %v1377
    %v1757 = vunpack.c.l.b16 %v1378
    %v1758 = vunpack.c.h.b16 %v1378
    %v1759 = vunpack.c.l.b16 %v1379
    %v1760 = vunpack.c.h.b16 %v1379
    %v1761 = vunpack.c.l.b16 %v1380
    %v1762 = vunpack.c.h.b16 %v1380
    %v1763 = vunpack.c.l.b16 %v1381
    %v1764 = vunpack.c.h.b16 %v1381
    %v1765 = vunpack.c.l.b16 %v1382
    %v1766 = vunpack.c.h.b16 %v1382
    %v1767 = vunpack.c.l.b16 %v1383
    %v1768 = vunpack.c.h.b16 %v1383
    %v1769 = vunpack.c.l.b16 %v1384
    %v1770 = vunpack.c.h.b16 %v1384
    %v1771 = vunpack.c.l.b16 %v1385
    %v1772 = vunpack.c.h.b16 %v1385
    %v1773 = vunpack.c.l.b16 %v1386
    %v1774 = vunpack.c.h.b16 %v1386
    %v1775 = vunpack.c.l.b16 %v1387
    %v1776 = vunpack.c.h.b16 %v1387
    %v1777 = vunpack.c.l.b16 %v1388
    %v1778 = vunpack.c.h.b16 %v1388
    %v1779 = vunpack.c.l.b16 %v1389
    %v1780 = vunpack.c.h.b16 %v1389
    %v1781 = vunpack.c.l.b16 %v1390
    %v1782 = vunpack.c.h.b16 %v1390
    %v1783 = vunpack.c.l.b16 %v1391
    %v1784 = vunpack.c.h.b16 %v1391
    %v1785 = vunpack.c.l.b16 %v1392
    %v1786 = vunpack.c.h.b16 %v1392
    %v1787 = vunpack.c.l.b16 %v1393
    %v1788 = vunpack.c.h.b16 %v1393
    %v1789 = vunpack.c.l.b16 %v1394
    %v1790 = vunpack.c.h.b16 %v1394
    %v1791 = vunpack.c.l.b16 %v1395
    %v1792 = vunpack.c.h.b16 %v1395
    %v1793 = vunpack.c.l.b16 %v1396
    %v1794 = vunpack.c.h.b16 %v1396
    %v1795 = vunpack.c.l.b16 %v1397
    %v1796 = vunpack.c.h.b16 %v1397
    %v1797 = vunpack.c.l.b16 %v1398
    %v1798 = vunpack.c.h.b16 %v1398
    %v1799 = vunpack.c.l.b16 %v1399
    %v1800 = vunpack.c.h.b16 %v1399
    %v1801 = vunpack.c.l.b16 %v1400
    %v1802 = vunpack.c.h.b16 %v1400
    %v1803 = vunpack.c.l.b16 %v1401
    %v1804 = vunpack.c.h.b16 %v1401
    %v1805 = vunpack.c.l.b16 %v1402
    %v1806 = vunpack.c.h.b16 %v1402
    %v1807 = vunpack.c.l.b16 %v1403
    %v1808 = vunpack.c.h.b16 %v1403
    %v1809 = vunpack.c.l.b16 %v1404
    %v1810 = vunpack.c.h.b16 %v1404
    %v1811 = vunpack.c.l.b16 %v1405
    %v1812 = vunpack.c.h.b16 %v1405
    %v1813 = vpack.c.b16 %v1561, %v1557
    %v1814 = vpack.c.b16 %v1562, %v1558
    %v1815 = vpack.c.b16 %v1563, %v1559
    %v1816 = vpack.c.b16 %v1564, %v1560
    %v1817 = vpack.c.b16 %v1569, %v1565
    %v1818 = vpack.c.b16 %v1570, %v1566
    %v1819 = vpack.c.b16 %v1571, %v1567
    %v1820 = vpack.c.b16 %v1572, %v1568
    %v1821 = vpack.c.b16 %v1577, %v1573
    %v1822 = vpack.c.b16 %v1578, %v1574
    %v1823 = vpack.c.b16 %v1579, %v1575
    %v1824 = vpack.c.b16 %v1580, %v1576
    %v1825 = vpack.c.b16 %v1585, %v1581
    %v1826 = vpack.c.b16 %v1586, %v1582
    %v1827 = vpack.c.b16 %v1587, %v1583
    %v1828 = vpack.c.b16 %v1588, %v1584
    %v1829 = vpack.c.b16 %v1593, %v1589
    %v1830 = vpack.c.b16 %v1594, %v1590
    %v1831 = vpack.c.b16 %v1595, %v1591
    %v1832 = vpack.c.b16 %v1596, %v1592
    %v1833 = vpack.c.b16 %v1601, %v1597
    %v1834 = vpack.c.b16 %v1602, %v1598
    %v1835 = vpack.c.b16 %v1603, %v1599
    %v1836 = vpack.c.b16 %v1604, %v1600
    %v1837 = vpack.c.b16 %v1609, %v1605
    %v1838 = vpack.c.b16 %v1610, %v1606
    %v1839 = vpack.c.b16 %v1611, %v1607
    %v1840 = vpack.c.b16 %v1612, %v1608
    %v1841 = vpack.c.b16 %v1617, %v1613
    %v1842 = vpack.c.b16 %v1618, %v1614
    %v1843 = vpack.c.b16 %v1619, %v1615
    %v1844 = vpack.c.b16 %v1620, %v1616
    %v1845 = vpack.c.b16 %v1625, %v1621
    %v1846 = vpack.c.b16 %v1626, %v1622
    %v1847 = vpack.c.b16 %v1627, %v1623
    %v1848 = vpack.c.b16 %v1628, %v1624
    %v1849 = vpack.c.b16 %v1633, %v1629
    %v1850 = vpack.c.b16 %v1634, %v1630
    %v1851 = vpack.c.b16 %v1635, %v1631
    %v1852 = vpack.c.b16 %v1636, %v1632
    %v1853 = vpack.c.b16 %v1641, %v1637
    %v1854 = vpack.c.b16 %v1642, %v1638
    %v1855 = vpack.c.b16 %v1643, %v1639
    %v1856 = vpack.c.b16 %v1644, %v1640
    %v1857 = vpack.c.b16 %v1649, %v1645
    %v1858 = vpack.c.b16 %v1650, %v1646
    %v1859 = vpack.c.b16 %v1651, %v1647
    %v1860 = vpack.c.b16 %v1652, %v1648
    %v1861 = vpack.c.b16 %v1657, %v1653
    %v1862 = vpack.c.b16 %v1658, %v1654
    %v1863 = vpack.c.b16 %v1659, %v1655
    %v1864 = vpack.c.b16 %v1660, %v1656
    %v1865 = vpack.c.b16 %v1665, %v1661
    %v1866 = vpack.c.b16 %v1666, %v1662
    %v1867 = vpack.c.b16 %v1667, %v1663
    %v1868 = vpack.c.b16 %v1668, %v1664
    %v1869 = vpack.c.b16 %v1673, %v1669
    %v1870 = vpack.c.b16 %v1674, %v1670
    %v1871 = vpack.c.b16 %v1675, %v1671
    %v1872 = vpack.c.b16 %v1676, %v1672
    %v1873 = vpack.c.b16 %v1681, %v1677
    %v1874 = vpack.c.b16 %v1682, %v1678
    %v1875 = vpack.c.b16 %v1683, %v1679
    %v1876 = vpack.c.b16 %v1684, %v1680
    %v1877 = vpack.c.b16 %v1689, %v1685
    %v1878 = vpack.c.b16 %v1690, %v1686
    %v1879 = vpack.c.b16 %v1691, %v1687
    %v1880 = vpack.c.b16 %v1692, %v1688
    %v1881 = vpack.c.b16 %v1697, %v1693
    %v1882 = vpack.c.b16 %v1698, %v1694
    %v1883 = vpack.c.b16 %v1699, %v1695
    %v1884 = vpack.c.b16 %v1700, %v1696
    %v1885 = vpack.c.b16 %v1705, %v1701
    %v1886 = vpack.c.b16 %v1706, %v1702
    %v1887 = vpack.c.b16 %v1707, %v1703
    %v1888 = vpack.c.b16 %v1708, %v1704
    %v1889 = vpack.c.b16 %v1713, %v1709
    %v1890 = vpack.c.b16 %v1714, %v1710
    %v1891 = vpack.c.b16 %v1715, %v1711
    %v1892 = vpack.c.b16 %v1716, %v1712
    %v1893 = vpack.c.b16 %v1721, %v1717
    %v1894 = vpack.c.b16 %v1722, %v1718
    %v1895 = vpack.c.b16 %v1723, %v1719
    %v1896 = vpack.c.b16 %v1724, %v1720
    %v1897 = vpack.c.b16 %v1729, %v1725
    %v1898 = vpack.c.b16 %v1730, %v1726
    %v1899 = vpack.c.b16 %v1731, %v1727
    %v1900 = vpack.c.b16 %v1732, %v1728
    %v1901 = vpack.c.b16 %v1737, %v1733
    %v1902 = vpack.c.b16 %v1738, %v1734
    %v1903 = vpack.c.b16 %v1739, %v1735
    %v1904 = vpack.c.b16 %v1740, %v1736
    %v1905 = vpack.c.b16 %v1745, %v1741
    %v1906 = vpack.c.b16 %v1746, %v1742
    %v1907 = vpack.c.b16 %v1747, %v1743
    %v1908 = vpack.c.b16 %v1748, %v1744
    %v1909 = vpack.c.b16 %v1753, %v1749
    %v1910 = vpack.c.b16 %v1754, %v1750
    %v1911 = vpack.c.b16 %v1755, %v1751
    %v1912 = vpack.c.b16 %v1756, %v1752
    %v1913 = vpack.c.b16 %v1761, %v1757
    %v1914 = vpack.c.b16 %v1762, %v1758
    %v1915 = vpack.c.b16 %v1763, %v1759
    %v1916 = vpack.c.b16 %v1764, %v1760
    %v1917 = vpack.c.b16 %v1769, %v1765
    %v1918 = vpack.c.b16 %v1770, %v1766
    %v1919 = vpack.c.b16 %v1771, %v1767
    %v1920 = vpack.c.b16 %v1772, %v1768
    %v1921 = vpack.c.b16 %v1777, %v1773
    %v1922 = vpack.c.b16 %v1778, %v1774
    %v1923 = vpack.c.b16 %v1779, %v1775
    %v1924 = vpack.c.b16 %v1780, %v1776
    %v1925 = vpack.c.b16 %v1785, %v1781
    %v1926 = vpack.c.b16 %v1786, %v1782
    %v1927 = vpack.c.b16 %v1787, %v1783
    %v1928 = vpack.c.b16 %v1788, %v1784
    %v1929 = vpack.c.b16 %v1793, %v1789
    %v1930 = vpack.c.b16 %v1794, %v1790
    %v1931 = vpack.c.b16 %v1795, %v1791
    %v1932 = vpack.c.b16 %v1796, %v1792
    %v1933 = vpack.c.b16 %v1801, %v1797
    %v1934 = vpack.c.b16 %v1802, %v1798
    %v1935 = vpack.c.b16 %v1803, %v1799
    %v1936 = vpack.c.b16 %v1804, %v1800
    %v1937 = vpack.c.b16 %v1809, %v1805
    %v1938 = vpack.c.b16 %v1810, %v1806
    %v1939 = vpack.c.b16 %v1811, %v1807
    %v1940 = vpack.c.b16 %v1812, %v1808
    %2069 = vmatprep.subr.bf16.mxu0 %v1842
    %2070 = vmatpush1.bf16.msra.mxu0 %v1841
    %2071 = vmatprep.subr.bf16.mxu0 %v1838
    %2072 = vmatpush1.bf16.msra.mxu0 %v1837
    %2073 = vmatprep.subr.bf16.mxu0 %v1834
    %2074 = vmatpush1.bf16.msra.mxu0 %v1833
    %2075 = vmatprep.subr.bf16.mxu0 %v1830
    %2076 = vmatpush1.bf16.msra.mxu0 %v1829
    %2077 = vmatprep.subr.bf16.mxu0 %v1826
    %2078 = vmatpush1.bf16.msra.mxu0 %v1825
    %2079 = vmatprep.subr.bf16.mxu0 %v1822
    %2080 = vmatpush1.bf16.msra.mxu0 %v1821
    %2081 = vmatprep.subr.bf16.mxu0 %v1818
    %2082 = vmatpush1.bf16.msra.mxu0 %v1817
    %2083 = vmatprep.subr.bf16.mxu0 %v1814
    %2084 = vmatpush1.bf16.msra.mxu0 %v1813
    %2085 = vmatprep.subr.bf16.mxu0 %v1874
    %2086 = vmatpush2.bf16.msra.mxu0 %v1873
    %2087 = vmatprep.subr.bf16.mxu0 %v1870
    %2088 = vmatpush2.bf16.msra.mxu0 %v1869
    %2089 = vmatprep.subr.bf16.mxu0 %v1866
    %2090 = vmatpush2.bf16.msra.mxu0 %v1865
    %2091 = vmatprep.subr.bf16.mxu0 %v1862
    %2092 = vmatpush2.bf16.msra.mxu0 %v1861
    %2093 = vmatprep.subr.bf16.mxu0 %v1858
    %2094 = vmatpush2.bf16.msra.mxu0 %v1857
    %2095 = vmatprep.subr.bf16.mxu0 %v1854
    %2096 = vmatpush2.bf16.msra.mxu0 %v1853
    %2097 = vmatprep.subr.bf16.mxu0 %v1850
    %2098 = vmatpush2.bf16.msra.mxu0 %v1849
    %2099 = vmatprep.subr.bf16.mxu0 %v1846
    %2100 = vmatpush2.bf16.msra.mxu0 %v1845
    %2101 = vmatprep.mubr.bf16.mxu0 %v312
    %2102 = vmatmul.mubr.bf16.gmra.mxu0 %v311
    %v2103 = vpop.f32.mrf.mxu0
    %v2104 = vadd.f32 %v1412, %v2103
    %v2105 = vpop.f32.mrf.mxu0
    %v2106 = vadd.f32 %v1416, %v2105
    %v2107 = vpop.f32.mrf.mxu0
    %v2108 = vpop.f32.mrf.mxu0
    %2109 = vdwg.mxu0
    %2110 = vmatprep.subr.bf16.mxu0 %v1906
    %2111 = vmatpush1.bf16.msra.mxu0 %v1905
    %2112 = vmatprep.subr.bf16.mxu0 %v1902
    %2113 = vmatpush1.bf16.msra.mxu0 %v1901
    %2114 = vmatprep.subr.bf16.mxu0 %v1898
    %2115 = vmatpush1.bf16.msra.mxu0 %v1897
    %2116 = vmatprep.subr.bf16.mxu0 %v1894
    %2117 = vmatpush1.bf16.msra.mxu0 %v1893
    %2118 = vmatprep.subr.bf16.mxu0 %v1890
    %2119 = vmatpush1.bf16.msra.mxu0 %v1889
    %2120 = vmatprep.subr.bf16.mxu0 %v1886
    %2121 = vmatpush1.bf16.msra.mxu0 %v1885
    %2122 = vmatprep.subr.bf16.mxu0 %v1882
    %2123 = vmatpush1.bf16.msra.mxu0 %v1881
    %2124 = vmatprep.subr.bf16.mxu0 %v1878
    %2125 = vmatpush1.bf16.msra.mxu0 %v1877
    %2126 = vmatprep.subr.bf16.mxu0 %v1938
    %2127 = vmatpush2.bf16.msra.mxu0 %v1937
    %2128 = vmatprep.subr.bf16.mxu0 %v1934
    %2129 = vmatpush2.bf16.msra.mxu0 %v1933
    %2130 = vmatprep.subr.bf16.mxu0 %v1930
    %2131 = vmatpush2.bf16.msra.mxu0 %v1929
    %2132 = vmatprep.subr.bf16.mxu0 %v1926
    %2133 = vmatpush2.bf16.msra.mxu0 %v1925
    %2134 = vmatprep.subr.bf16.mxu0 %v1922
    %2135 = vmatpush2.bf16.msra.mxu0 %v1921
    %2136 = vmatprep.subr.bf16.mxu0 %v1918
    %2137 = vmatpush2.bf16.msra.mxu0 %v1917
    %2138 = vmatprep.subr.bf16.mxu0 %v1914
    %2139 = vmatpush2.bf16.msra.mxu0 %v1913
    %2140 = vmatprep.subr.bf16.mxu0 %v1910
    %2141 = vmatpush2.bf16.msra.mxu0 %v1909
    %2142 = vmatprep.mubr.bf16.mxu0 %v314
    %2143 = vmatmul.mubr.bf16.gmra.mxu0 %v313
    %v2144 = vpop.f32.mrf.mxu0
    %v2145 = vadd.f32 %v2104, %v2144
    %v2146 = vpop.f32.mrf.mxu0
    %v2147 = vadd.f32 %v2106, %v2146
    %v2148 = vpop.f32.mrf.mxu0
    %v2149 = vpop.f32.mrf.mxu0
    %2150 = vdwg.mxu0
    %2151 = vmatprep.subr.bf16.mxu0 %v1844
    %2152 = vmatpush1.bf16.msra.mxu0 %v1843
    %2153 = vmatprep.subr.bf16.mxu0 %v1840
    %2154 = vmatpush1.bf16.msra.mxu0 %v1839
    %2155 = vmatprep.subr.bf16.mxu0 %v1836
    %2156 = vmatpush1.bf16.msra.mxu0 %v1835
    %2157 = vmatprep.subr.bf16.mxu0 %v1832
    %2158 = vmatpush1.bf16.msra.mxu0 %v1831
    %2159 = vmatprep.subr.bf16.mxu0 %v1828
    %2160 = vmatpush1.bf16.msra.mxu0 %v1827
    %2161 = vmatprep.subr.bf16.mxu0 %v1824
    %2162 = vmatpush1.bf16.msra.mxu0 %v1823
    %2163 = vmatprep.subr.bf16.mxu0 %v1820
    %2164 = vmatpush1.bf16.msra.mxu0 %v1819
    %2165 = vmatprep.subr.bf16.mxu0 %v1816
    %2166 = vmatpush1.bf16.msra.mxu0 %v1815
    %2167 = vmatprep.subr.bf16.mxu0 %v1876
    %2168 = vmatpush2.bf16.msra.mxu0 %v1875
    %2169 = vmatprep.subr.bf16.mxu0 %v1872
    %2170 = vmatpush2.bf16.msra.mxu0 %v1871
    %2171 = vmatprep.subr.bf16.mxu0 %v1868
    %2172 = vmatpush2.bf16.msra.mxu0 %v1867
    %2173 = vmatprep.subr.bf16.mxu0 %v1864
    %2174 = vmatpush2.bf16.msra.mxu0 %v1863
    %2175 = vmatprep.subr.bf16.mxu0 %v1860
    %2176 = vmatpush2.bf16.msra.mxu0 %v1859
    %2177 = vmatprep.subr.bf16.mxu0 %v1856
    %2178 = vmatpush2.bf16.msra.mxu0 %v1855
    %2179 = vmatprep.subr.bf16.mxu0 %v1852
    %2180 = vmatpush2.bf16.msra.mxu0 %v1851
    %2181 = vmatprep.subr.bf16.mxu0 %v1848
    %2182 = vmatpush2.bf16.msra.mxu0 %v1847
    %2183 = vmatprep.mubr.bf16.mxu0 %v312
    %2184 = vmatmul.mubr.bf16.gmra.mxu0 %v311
    %v2185 = vpop.f32.mrf.mxu0
    %v2186 = vadd.f32 %v1420, %v2185
    %v2187 = vpop.f32.mrf.mxu0
    %v2188 = vadd.f32 %v1424, %v2187
    %v2189 = vpop.f32.mrf.mxu0
    %v2190 = vpop.f32.mrf.mxu0
    %2191 = vdwg.mxu0
    %2192 = vmatprep.subr.bf16.mxu0 %v1908
    %2193 = vmatpush1.bf16.msra.mxu0 %v1907
    %2194 = vmatprep.subr.bf16.mxu0 %v1904
    %2195 = vmatpush1.bf16.msra.mxu0 %v1903
    %2196 = vmatprep.subr.bf16.mxu0 %v1900
    %2197 = vmatpush1.bf16.msra.mxu0 %v1899
    %2198 = vmatprep.subr.bf16.mxu0 %v1896
    %2199 = vmatpush1.bf16.msra.mxu0 %v1895
    %2200 = vmatprep.subr.bf16.mxu0 %v1892
    %2201 = vmatpush1.bf16.msra.mxu0 %v1891
    %2202 = vmatprep.subr.bf16.mxu0 %v1888
    %2203 = vmatpush1.bf16.msra.mxu0 %v1887
    %2204 = vmatprep.subr.bf16.mxu0 %v1884
    %2205 = vmatpush1.bf16.msra.mxu0 %v1883
    %2206 = vmatprep.subr.bf16.mxu0 %v1880
    %2207 = vmatpush1.bf16.msra.mxu0 %v1879
    %2208 = vmatprep.subr.bf16.mxu0 %v1940
    %2209 = vmatpush2.bf16.msra.mxu0 %v1939
    %2210 = vmatprep.subr.bf16.mxu0 %v1936
    %2211 = vmatpush2.bf16.msra.mxu0 %v1935
    %2212 = vmatprep.subr.bf16.mxu0 %v1932
    %2213 = vmatpush2.bf16.msra.mxu0 %v1931
    %2214 = vmatprep.subr.bf16.mxu0 %v1928
    %2215 = vmatpush2.bf16.msra.mxu0 %v1927
    %2216 = vmatprep.subr.bf16.mxu0 %v1924
    %2217 = vmatpush2.bf16.msra.mxu0 %v1923
    %2218 = vmatprep.subr.bf16.mxu0 %v1920
    %2219 = vmatpush2.bf16.msra.mxu0 %v1919
    %2220 = vmatprep.subr.bf16.mxu0 %v1916
    %2221 = vmatpush2.bf16.msra.mxu0 %v1915
    %2222 = vmatprep.subr.bf16.mxu0 %v1912
    %2223 = vmatpush2.bf16.msra.mxu0 %v1911
    %2224 = vmatprep.mubr.bf16.mxu0 %v314
    %2225 = vmatmul.mubr.bf16.gmra.mxu0 %v313
    %v2226 = vpop.f32.mrf.mxu0
    %v2227 = vadd.f32 %v2186, %v2226
    %v2228 = vpop.f32.mrf.mxu0
    %v2229 = vadd.f32 %v2188, %v2228
    %v2230 = vpop.f32.mrf.mxu0
    %v2231 = vpop.f32.mrf.mxu0
    %2232 = vdwg.mxu0
    %v2233 = vmax.f32 %v2145, 0.0
    %v2234 = vmax.f32 %v2147, 0.0
    %v2235 = vmax.f32 %v2227, 0.0
    %v2236 = vmax.f32 %v2229, 0.0
    %v2237 = vpack.c.bf16 %v2233, %v2233
    %v2238 = vpack.c.bf16 %v2234, %v2234
    %v2239 = vpack.c.bf16 %v2235, %v2235
    %v2240 = vpack.c.bf16 %v2236, %v2236
    %v2241 = vld [vmem:[%s3] sm:$0xf]
    %v2242 = vld [vmem:[%s3 + $0x4] sm:$0xf]
    %v2243 = vld [vmem:[%s3 + $0x8] sm:$0xf]
    %v2244 = vld [vmem:[%s3 + $0xc] sm:$0xf]
    %v2245 = vld [vmem:[%s3 + $0x10] sm:$0xf]
    %v2246 = vld [vmem:[%s3 + $0x14] sm:$0xf]
    %v2247 = vld [vmem:[%s3 + $0x18] sm:$0xf]
    %v2248 = vld [vmem:[%s3 + $0x1c] sm:$0xf]
    %v2249 = vld [vmem:[%s3 + $0x20] sm:$0xf]
    %v2250 = vld [vmem:[%s3 + $0x24] sm:$0xf]
    %v2251 = vld [vmem:[%s3 + $0x28] sm:$0xf]
    %v2252 = vld [vmem:[%s3 + $0x2c] sm:$0xf]
    %v2253 = vld [vmem:[%s3 + $0x30] sm:$0xf]
    %v2254 = vld [vmem:[%s3 + $0x34] sm:$0xf]
    %v2255 = vld [vmem:[%s3 + $0x38] sm:$0xf]
    %v2256 = vld [vmem:[%s3 + $0x3c] sm:$0xf]
    %v2257 = vld [vmem:[%s3 + $0x40] sm:$0xf]
    %v2258 = vld [vmem:[%s3 + $0x44] sm:$0xf]
    %v2259 = vld [vmem:[%s3 + $0x48] sm:$0xf]
    %v2260 = vld [vmem:[%s3 + $0x4c] sm:$0xf]
    %v2261 = vld [vmem:[%s3 + $0x50] sm:$0xf]
    %v2262 = vld [vmem:[%s3 + $0x54] sm:$0xf]
    %v2263 = vld [vmem:[%s3 + $0x58] sm:$0xf]
    %v2264 = vld [vmem:[%s3 + $0x5c] sm:$0xf]
    %v2265 = vld [vmem:[%s3 + $0x60] sm:$0xf]
    %v2266 = vld [vmem:[%s3 + $0x64] sm:$0xf]
    %v2267 = vld [vmem:[%s3 + $0x68] sm:$0xf]
    %v2268 = vld [vmem:[%s3 + $0x6c] sm:$0xf]
    %v2269 = vld [vmem:[%s3 + $0x70] sm:$0xf]
    %v2270 = vld [vmem:[%s3 + $0x74] sm:$0xf]
    %v2271 = vld [vmem:[%s3 + $0x78] sm:$0xf]
    %v2272 = vld [vmem:[%s3 + $0x7c] sm:$0xf]
    %v2273 = vld [vmem:[%s3 + $0x80] sm:$0xf]
    %v2274 = vld [vmem:[%s3 + $0x84] sm:$0xf]
    %v2275 = vld [vmem:[%s3 + $0x88] sm:$0xf]
    %v2276 = vld [vmem:[%s3 + $0x8c] sm:$0xf]
    %v2277 = vld [vmem:[%s3 + $0x90] sm:$0xf]
    %v2278 = vld [vmem:[%s3 + $0x94] sm:$0xf]
    %v2279 = vld [vmem:[%s3 + $0x98] sm:$0xf]
    %v2280 = vld [vmem:[%s3 + $0x9c] sm:$0xf]
    %v2281 = vld [vmem:[%s3 + $0xa0] sm:$0xf]
    %v2282 = vld [vmem:[%s3 + $0xa4] sm:$0xf]
    %v2283 = vld [vmem:[%s3 + $0xa8] sm:$0xf]
    %v2284 = vld [vmem:[%s3 + $0xac] sm:$0xf]
    %v2285 = vld [vmem:[%s3 + $0xb0] sm:$0xf]
    %v2286 = vld [vmem:[%s3 + $0xb4] sm:$0xf]
    %v2287 = vld [vmem:[%s3 + $0xb8] sm:$0xf]
    %v2288 = vld [vmem:[%s3 + $0xbc] sm:$0xf]
    %v2289 = vld [vmem:[%s3 + $0xc0] sm:$0xf]
    %v2290 = vld [vmem:[%s3 + $0xc4] sm:$0xf]
    %v2291 = vld [vmem:[%s3 + $0xc8] sm:$0xf]
    %v2292 = vld [vmem:[%s3 + $0xcc] sm:$0xf]
    %v2293 = vld [vmem:[%s3 + $0xd0] sm:$0xf]
    %v2294 = vld [vmem:[%s3 + $0xd4] sm:$0xf]
    %v2295 = vld [vmem:[%s3 + $0xd8] sm:$0xf]
    %v2296 = vld [vmem:[%s3 + $0xdc] sm:$0xf]
    %v2297 = vld [vmem:[%s3 + $0xe0] sm:$0xf]
    %v2298 = vld [vmem:[%s3 + $0xe4] sm:$0xf]
    %v2299 = vld [vmem:[%s3 + $0xe8] sm:$0xf]
    %v2300 = vld [vmem:[%s3 + $0xec] sm:$0xf]
    %v2301 = vld [vmem:[%s3 + $0xf0] sm:$0xf]
    %v2302 = vld [vmem:[%s3 + $0xf4] sm:$0xf]
    %v2303 = vld [vmem:[%s3 + $0xf8] sm:$0xf]
    %v2304 = vld [vmem:[%s3 + $0xfc] sm:$0xf]
    %v2305 = vld [vmem:[%s3 + $0x100] sm:$0xf]
    %v2306 = vld [vmem:[%s3 + $0x104] sm:$0xf]
    %v2307 = vld [vmem:[%s3 + $0x108] sm:$0xf]
    %v2308 = vld [vmem:[%s3 + $0x10c] sm:$0xf]
    %v2309 = vld [vmem:[%s3 + $0x110] sm:$0xf]
    %v2310 = vld [vmem:[%s3 + $0x114] sm:$0xf]
    %v2311 = vld [vmem:[%s3 + $0x118] sm:$0xf]
    %v2312 = vld [vmem:[%s3 + $0x11c] sm:$0xf]
    %v2313 = vld [vmem:[%s3 + $0x120] sm:$0xf]
    %v2314 = vld [vmem:[%s3 + $0x124] sm:$0xf]
    %v2315 = vld [vmem:[%s3 + $0x128] sm:$0xf]
    %v2316 = vld [vmem:[%s3 + $0x12c] sm:$0xf]
    %v2317 = vld [vmem:[%s3 + $0x130] sm:$0xf]
    %v2318 = vld [vmem:[%s3 + $0x134] sm:$0xf]
    %v2319 = vld [vmem:[%s3 + $0x138] sm:$0xf]
    %v2320 = vld [vmem:[%s3 + $0x13c] sm:$0xf]
    %v2321 = vld [vmem:[%s3 + $0x140] sm:$0xf]
    %v2322 = vld [vmem:[%s3 + $0x144] sm:$0xf]
    %v2323 = vld [vmem:[%s3 + $0x148] sm:$0xf]
    %v2324 = vld [vmem:[%s3 + $0x14c] sm:$0xf]
    %v2325 = vld [vmem:[%s3 + $0x150] sm:$0xf]
    %v2326 = vld [vmem:[%s3 + $0x154] sm:$0xf]
    %v2327 = vld [vmem:[%s3 + $0x158] sm:$0xf]
    %v2328 = vld [vmem:[%s3 + $0x15c] sm:$0xf]
    %v2329 = vld [vmem:[%s3 + $0x160] sm:$0xf]
    %v2330 = vld [vmem:[%s3 + $0x164] sm:$0xf]
    %v2331 = vld [vmem:[%s3 + $0x168] sm:$0xf]
    %v2332 = vld [vmem:[%s3 + $0x16c] sm:$0xf]
    %v2333 = vld [vmem:[%s3 + $0x170] sm:$0xf]
    %v2334 = vld [vmem:[%s3 + $0x174] sm:$0xf]
    %v2335 = vld [vmem:[%s3 + $0x178] sm:$0xf]
    %v2336 = vld [vmem:[%s3 + $0x17c] sm:$0xf]
    %v2337 = vld [vmem:[%s3 + $0x180] sm:$0xf]
    %v2338 = vld [vmem:[%s3 + $0x184] sm:$0xf]
    %v2339 = vld [vmem:[%s3 + $0x188] sm:$0xf]
    %v2340 = vld [vmem:[%s3 + $0x18c] sm:$0xf]
    %v2341 = vld [vmem:[%s3 + $0x190] sm:$0xf]
    %v2342 = vld [vmem:[%s3 + $0x194] sm:$0xf]
    %v2343 = vld [vmem:[%s3 + $0x198] sm:$0xf]
    %v2344 = vld [vmem:[%s3 + $0x19c] sm:$0xf]
    %v2345 = vld [vmem:[%s3 + $0x1a0] sm:$0xf]
    %v2346 = vld [vmem:[%s3 + $0x1a4] sm:$0xf]
    %v2347 = vld [vmem:[%s3 + $0x1a8] sm:$0xf]
    %v2348 = vld [vmem:[%s3 + $0x1ac] sm:$0xf]
    %v2349 = vld [vmem:[%s3 + $0x1b0] sm:$0xf]
    %v2350 = vld [vmem:[%s3 + $0x1b4] sm:$0xf]
    %v2351 = vld [vmem:[%s3 + $0x1b8] sm:$0xf]
    %v2352 = vld [vmem:[%s3 + $0x1bc] sm:$0xf]
    %v2353 = vld [vmem:[%s3 + $0x1c0] sm:$0xf]
    %v2354 = vld [vmem:[%s3 + $0x1c4] sm:$0xf]
    %v2355 = vld [vmem:[%s3 + $0x1c8] sm:$0xf]
    %v2356 = vld [vmem:[%s3 + $0x1cc] sm:$0xf]
    %v2357 = vld [vmem:[%s3 + $0x1d0] sm:$0xf]
    %v2358 = vld [vmem:[%s3 + $0x1d4] sm:$0xf]
    %v2359 = vld [vmem:[%s3 + $0x1d8] sm:$0xf]
    %v2360 = vld [vmem:[%s3 + $0x1dc] sm:$0xf]
    %v2361 = vld [vmem:[%s3 + $0x1e0] sm:$0xf]
    %v2362 = vld [vmem:[%s3 + $0x1e4] sm:$0xf]
    %v2363 = vld [vmem:[%s3 + $0x1e8] sm:$0xf]
    %v2364 = vld [vmem:[%s3 + $0x1ec] sm:$0xf]
    %v2365 = vld [vmem:[%s3 + $0x1f0] sm:$0xf]
    %v2366 = vld [vmem:[%s3 + $0x1f4] sm:$0xf]
    %v2367 = vld [vmem:[%s3 + $0x1f8] sm:$0xf]
    %v2368 = vld [vmem:[%s3 + $0x1fc] sm:$0xf]
    %v2433 = vunpack.c.l.b16 %v2305
    %v2434 = vunpack.c.l.b16 %v2306
    %v2435 = vunpack.c.l.b16 %v2307
    %v2436 = vunpack.c.l.b16 %v2308
    %v2437 = vunpack.c.l.b16 %v2309
    %v2438 = vunpack.c.l.b16 %v2310
    %v2439 = vunpack.c.l.b16 %v2311
    %v2440 = vunpack.c.l.b16 %v2312
    %v2441 = vunpack.c.l.b16 %v2313
    %v2442 = vunpack.c.l.b16 %v2314
    %v2443 = vunpack.c.l.b16 %v2315
    %v2444 = vunpack.c.l.b16 %v2316
    %v2445 = vunpack.c.l.b16 %v2317
    %v2446 = vunpack.c.l.b16 %v2318
    %v2447 = vunpack.c.l.b16 %v2319
    %v2448 = vunpack.c.l.b16 %v2320
    %v2449 = vunpack.c.l.b16 %v2321
    %v2450 = vunpack.c.l.b16 %v2322
    %v2451 = vunpack.c.l.b16 %v2323
    %v2452 = vunpack.c.l.b16 %v2324
    %v2453 = vunpack.c.l.b16 %v2325
    %v2454 = vunpack.c.l.b16 %v2326
    %v2455 = vunpack.c.l.b16 %v2327
    %v2456 = vunpack.c.l.b16 %v2328
    %v2457 = vunpack.c.l.b16 %v2329
    %v2458 = vunpack.c.l.b16 %v2330
    %v2459 = vunpack.c.l.b16 %v2331
    %v2460 = vunpack.c.l.b16 %v2332
    %v2461 = vunpack.c.l.b16 %v2333
    %v2462 = vunpack.c.l.b16 %v2334
    %v2463 = vunpack.c.l.b16 %v2335
    %v2464 = vunpack.c.l.b16 %v2336
    %v2465 = vunpack.c.l.b16 %v2337
    %v2466 = vunpack.c.l.b16 %v2338
    %v2467 = vunpack.c.l.b16 %v2339
    %v2468 = vunpack.c.l.b16 %v2340
    %v2469 = vunpack.c.l.b16 %v2341
    %v2470 = vunpack.c.l.b16 %v2342
    %v2471 = vunpack.c.l.b16 %v2343
    %v2472 = vunpack.c.l.b16 %v2344
    %v2473 = vunpack.c.l.b16 %v2345
    %v2474 = vunpack.c.l.b16 %v2346
    %v2475 = vunpack.c.l.b16 %v2347
    %v2476 = vunpack.c.l.b16 %v2348
    %v2477 = vunpack.c.l.b16 %v2349
    %v2478 = vunpack.c.l.b16 %v2350
    %v2479 = vunpack.c.l.b16 %v2351
    %v2480 = vunpack.c.l.b16 %v2352
    %v2481 = vunpack.c.l.b16 %v2353
    %v2482 = vunpack.c.l.b16 %v2354
    %v2483 = vunpack.c.l.b16 %v2355
    %v2484 = vunpack.c.l.b16 %v2356
    %v2485 = vunpack.c.l.b16 %v2357
    %v2486 = vunpack.c.l.b16 %v2358
    %v2487 = vunpack.c.l.b16 %v2359
    %v2488 = vunpack.c.l.b16 %v2360
    %v2489 = vunpack.c.l.b16 %v2361
    %v2490 = vunpack.c.l.b16 %v2362
    %v2491 = vunpack.c.l.b16 %v2363
    %v2492 = vunpack.c.l.b16 %v2364
    %v2493 = vunpack.c.l.b16 %v2365
    %v2494 = vunpack.c.l.b16 %v2366
    %v2495 = vunpack.c.l.b16 %v2367
    %v2496 = vunpack.c.l.b16 %v2368
    %v2497 = vpack.c.b16 %v2434, %v2433
    %v2498 = vpack.c.b16 %v2436, %v2435
    %v2499 = vpack.c.b16 %v2438, %v2437
    %v2500 = vpack.c.b16 %v2440, %v2439
    %v2501 = vpack.c.b16 %v2442, %v2441
    %v2502 = vpack.c.b16 %v2444, %v2443
    %v2503 = vpack.c.b16 %v2446, %v2445
    %v2504 = vpack.c.b16 %v2448, %v2447
    %v2505 = vpack.c.b16 %v2450, %v2449
    %v2506 = vpack.c.b16 %v2452, %v2451
    %v2507 = vpack.c.b16 %v2454, %v2453
    %v2508 = vpack.c.b16 %v2456, %v2455
    %v2509 = vpack.c.b16 %v2458, %v2457
    %v2510 = vpack.c.b16 %v2460, %v2459
    %v2511 = vpack.c.b16 %v2462, %v2461
    %v2512 = vpack.c.b16 %v2464, %v2463
    %v2513 = vpack.c.b16 %v2466, %v2465
    %v2514 = vpack.c.b16 %v2468, %v2467
    %v2515 = vpack.c.b16 %v2470, %v2469
    %v2516 = vpack.c.b16 %v2472, %v2471
    %v2517 = vpack.c.b16 %v2474, %v2473
    %v2518 = vpack.c.b16 %v2476, %v2475
    %v2519 = vpack.c.b16 %v2478, %v2477
    %v2520 = vpack.c.b16 %v2480, %v2479
    %v2521 = vpack.c.b16 %v2482, %v2481
    %v2522 = vpack.c.b16 %v2484, %v2483
    %v2523 = vpack.c.b16 %v2486, %v2485
    %v2524 = vpack.c.b16 %v2488, %v2487
    %v2525 = vpack.c.b16 %v2490, %v2489
    %v2526 = vpack.c.b16 %v2492, %v2491
    %v2527 = vpack.c.b16 %v2494, %v2493
    %v2528 = vpack.c.b16 %v2496, %v2495
    %2561 = vmatprep.subr.bf16.mxu0 0
    %2562 = vmatpush1.bf16.msra.mxu0 %v2504
    %2563 = vmatprep.subr.bf16.mxu0 0
    %2564 = vmatpush1.bf16.msra.mxu0 %v2503
    %2565 = vmatprep.subr.bf16.mxu0 0
    %2566 = vmatpush1.bf16.msra.mxu0 %v2502
    %2567 = vmatprep.subr.bf16.mxu0 0
    %2568 = vmatpush1.bf16.msra.mxu0 %v2501
    %2569 = vmatprep.subr.bf16.mxu0 0
    %2570 = vmatpush1.bf16.msra.mxu0 %v2500
    %2571 = vmatprep.subr.bf16.mxu0 0
    %2572 = vmatpush1.bf16.msra.mxu0 %v2499
    %2573 = vmatprep.subr.bf16.mxu0 0
    %2574 = vmatpush1.bf16.msra.mxu0 %v2498
    %2575 = vmatprep.subr.bf16.mxu0 0
    %2576 = vmatpush1.bf16.msra.mxu0 %v2497
    %2577 = vmatprep.subr.bf16.mxu0 0
    %2578 = vmatpush2.bf16.msra.mxu0 %v2512
    %2579 = vmatprep.subr.bf16.mxu0 0
    %2580 = vmatpush2.bf16.msra.mxu0 %v2511
    %2581 = vmatprep.subr.bf16.mxu0 0
    %2582 = vmatpush2.bf16.msra.mxu0 %v2510
    %2583 = vmatprep.subr.bf16.mxu0 0
    %2584 = vmatpush2.bf16.msra.mxu0 %v2509
    %2585 = vmatprep.subr.bf16.mxu0 0
    %2586 = vmatpush2.bf16.msra.mxu0 %v2508
    %2587 = vmatprep.subr.bf16.mxu0 0
    %2588 = vmatpush2.bf16.msra.mxu0 %v2507
    %2589 = vmatprep.subr.bf16.mxu0 0
    %2590 = vmatpush2.bf16.msra.mxu0 %v2506
    %2591 = vmatprep.subr.bf16.mxu0 0
    %2592 = vmatpush2.bf16.msra.mxu0 %v2505
    %2593 = vmatprep.mubr.bf16.mxu0 %v2238
    %2594 = vmatmul.mubr.bf16.gmra.mxu0 %v2237
    %v2595 = vpop.f32.mrf.mxu0
    %v2596 = vadd.f32 0.0, %v2595
    %v2597 = vpop.f32.mrf.mxu0
    %v2598 = vpop.f32.mrf.mxu0
    %v2599 = vpop.f32.mrf.mxu0
    %2600 = vdwg.mxu0
    %2601 = vmatprep.subr.bf16.mxu0 0
    %2602 = vmatpush1.bf16.msra.mxu0 %v2520
    %2603 = vmatprep.subr.bf16.mxu0 0
    %2604 = vmatpush1.bf16.msra.mxu0 %v2519
    %2605 = vmatprep.subr.bf16.mxu0 0
    %2606 = vmatpush1.bf16.msra.mxu0 %v2518
    %2607 = vmatprep.subr.bf16.mxu0 0
    %2608 = vmatpush1.bf16.msra.mxu0 %v2517
    %2609 = vmatprep.subr.bf16.mxu0 0
    %2610 = vmatpush1.bf16.msra.mxu0 %v2516
    %2611 = vmatprep.subr.bf16.mxu0 0
    %2612 = vmatpush1.bf16.msra.mxu0 %v2515
    %2613 = vmatprep.subr.bf16.mxu0 0
    %2614 = vmatpush1.bf16.msra.mxu0 %v2514
    %2615 = vmatprep.subr.bf16.mxu0 0
    %2616 = vmatpush1.bf16.msra.mxu0 %v2513
    %2617 = vmatprep.subr.bf16.mxu0 0
    %2618 = vmatpush2.bf16.msra.mxu0 %v2528
    %2619 = vmatprep.subr.bf16.mxu0 0
    %2620 = vmatpush2.bf16.msra.mxu0 %v2527
    %2621 = vmatprep.subr.bf16.mxu0 0
    %2622 = vmatpush2.bf16.msra.mxu0 %v2526
    %2623 = vmatprep.subr.bf16.mxu0 0
    %2624 = vmatpush2.bf16.msra.mxu0 %v2525
    %2625 = vmatprep.subr.bf16.mxu0 0
    %2626 = vmatpush2.bf16.msra.mxu0 %v2524
    %2627 = vmatprep.subr.bf16.mxu0 0
    %2628 = vmatpush2.bf16.msra.mxu0 %v2523
    %2629 = vmatprep.subr.bf16.mxu0 0
    %2630 = vmatpush2.bf16.msra.mxu0 %v2522
    %2631 = vmatprep.subr.bf16.mxu0 0
    %2632 = vmatpush2.bf16.msra.mxu0 %v2521
    %2633 = vmatprep.mubr.bf16.mxu0 %v2240
    %2634 = vmatmul.mubr.bf16.gmra.mxu0 %v2239
    %v2635 = vpop.f32.mrf.mxu0
    %v2636 = vadd.f32 %v2596, %v2635
    %v2637 = vpop.f32.mrf.mxu0
    %v2638 = vpop.f32.mrf.mxu0
    %v2639 = vpop.f32.mrf.mxu0
    %2640 = vdwg.mxu0
    %v2705 = vunpack.c.l.b16 %v2241
    %v2706 = vunpack.c.l.b16 %v2242
    %v2707 = vunpack.c.l.b16 %v2243
    %v2708 = vunpack.c.l.b16 %v2244
    %v2709 = vunpack.c.l.b16 %v2245
    %v2710 = vunpack.c.l.b16 %v2246
    %v2711 = vunpack.c.l.b16 %v2247
    %v2712 = vunpack.c.l.b16 %v2248
    %v2713 = vunpack.c.l.b16 %v2249
    %v2714 = vunpack.c.l.b16 %v2250
    %v2715 = vunpack.c.l.b16 %v2251
    %v2716 = vunpack.c.l.b16 %v2252
    %v2717 = vunpack.c.l.b16 %v2253
    %v2718 = vunpack.c.l.b16 %v2254
    %v2719 = vunpack.c.l.b16 %v2255
    %v2720 = vunpack.c.l.b16 %v2256
    %v2721 = vunpack.c.l.b16 %v2257
    %v2722 = vunpack.c.l.b16 %v2258
    %v2723 = vunpack.c.l.b16 %v2259
    %v2724 = vunpack.c.l.b16 %v2260
    %v2725 = vunpack.c.l.b16 %v2261
    %v2726 = vunpack.c.l.b16 %v2262
    %v2727 = vunpack.c.l.b16 %v2263
    %v2728 = vunpack.c.l.b16 %v2264
    %v2729 = vunpack.c.l.b16 %v2265
    %v2730 = vunpack.c.l.b16 %v2266
    %v2731 = vunpack.c.l.b16 %v2267
    %v2732 = vunpack.c.l.b16 %v2268
    %v2733 = vunpack.c.l.b16 %v2269
    %v2734 = vunpack.c.l.b16 %v2270
    %v2735 = vunpack.c.l.b16 %v2271
    %v2736 = vunpack.c.l.b16 %v2272
    %v2737 = vunpack.c.l.b16 %v2273
    %v2738 = vunpack.c.l.b16 %v2274
    %v2739 = vunpack.c.l.b16 %v2275
    %v2740 = vunpack.c.l.b16 %v2276
    %v2741 = vunpack.c.l.b16 %v2277
    %v2742 = vunpack.c.l.b16 %v2278
    %v2743 = vunpack.c.l.b16 %v2279
    %v2744 = vunpack.c.l.b16 %v2280
    %v2745 = vunpack.c.l.b16 %v2281
    %v2746 = vunpack.c.l.b16 %v2282
    %v2747 = vunpack.c.l.b16 %v2283
    %v2748 = vunpack.c.l.b16 %v2284
    %v2749 = vunpack.c.l.b16 %v2285
    %v2750 = vunpack.c.l.b16 %v2286
    %v2751 = vunpack.c.l.b16 %v2287
    %v2752 = vunpack.c.l.b16 %v2288
    %v2753 = vunpack.c.l.b16 %v2289
    %v2754 = vunpack.c.l.b16 %v2290
    %v2755 = vunpack.c.l.b16 %v2291
    %v2756 = vunpack.c.l.b16 %v2292
    %v2757 = vunpack.c.l.b16 %v2293
    %v2758 = vunpack.c.l.b16 %v2294
    %v2759 = vunpack.c.l.b16 %v2295
    %v2760 = vunpack.c.l.b16 %v2296
    %v2761 = vunpack.c.l.b16 %v2297
    %v2762 = vunpack.c.l.b16 %v2298
    %v2763 = vunpack.c.l.b16 %v2299
    %v2764 = vunpack.c.l.b16 %v2300
    %v2765 = vunpack.c.l.b16 %v2301
    %v2766 = vunpack.c.l.b16 %v2302
    %v2767 = vunpack.c.l.b16 %v2303
    %v2768 = vunpack.c.l.b16 %v2304
    %v2769 = vpack.c.b16 %v2706, %v2705
    %v2770 = vpack.c.b16 %v2708, %v2707
    %v2771 = vpack.c.b16 %v2710, %v2709
    %v2772 = vpack.c.b16 %v2712, %v2711
    %v2773 = vpack.c.b16 %v2714, %v2713
    %v2774 = vpack.c.b16 %v2716, %v2715
    %v2775 = vpack.c.b16 %v2718, %v2717
    %v2776 = vpack.c.b16 %v2720, %v2719
    %v2777 = vpack.c.b16 %v2722, %v2721
    %v2778 = vpack.c.b16 %v2724, %v2723
    %v2779 = vpack.c.b16 %v2726, %v2725
    %v2780 = vpack.c.b16 %v2728, %v2727
    %v2781 = vpack.c.b16 %v2730, %v2729
    %v2782 = vpack.c.b16 %v2732, %v2731
    %v2783 = vpack.c.b16 %v2734, %v2733
    %v2784 = vpack.c.b16 %v2736, %v2735
    %v2785 = vpack.c.b16 %v2738, %v2737
    %v2786 = vpack.c.b16 %v2740, %v2739
    %v2787 = vpack.c.b16 %v2742, %v2741
    %v2788 = vpack.c.b16 %v2744, %v2743
    %v2789 = vpack.c.b16 %v2746, %v2745
    %v2790 = vpack.c.b16 %v2748, %v2747
    %v2791 = vpack.c.b16 %v2750, %v2749
    %v2792 = vpack.c.b16 %v2752, %v2751
    %v2793 = vpack.c.b16 %v2754, %v2753
    %v2794 = vpack.c.b16 %v2756, %v2755
    %v2795 = vpack.c.b16 %v2758, %v2757
    %v2796 = vpack.c.b16 %v2760, %v2759
    %v2797 = vpack.c.b16 %v2762, %v2761
    %v2798 = vpack.c.b16 %v2764, %v2763
    %v2799 = vpack.c.b16 %v2766, %v2765
    %v2800 = vpack.c.b16 %v2768, %v2767
    %2833 = vmatprep.subr.bf16.mxu0 0
    %2834 = vmatpush1.bf16.msra.mxu0 %v2776
    %2835 = vmatprep.subr.bf16.mxu0 0
    %2836 = vmatpush1.bf16.msra.mxu0 %v2775
    %2837 = vmatprep.subr.bf16.mxu0 0
    %2838 = vmatpush1.bf16.msra.mxu0 %v2774
    %2839 = vmatprep.subr.bf16.mxu0 0
    %2840 = vmatpush1.bf16.msra.mxu0 %v2773
    %2841 = vmatprep.subr.bf16.mxu0 0
    %2842 = vmatpush1.bf16.msra.mxu0 %v2772
    %2843 = vmatprep.subr.bf16.mxu0 0
    %2844 = vmatpush1.bf16.msra.mxu0 %v2771
    %2845 = vmatprep.subr.bf16.mxu0 0
    %2846 = vmatpush1.bf16.msra.mxu0 %v2770
    %2847 = vmatprep.subr.bf16.mxu0 0
    %2848 = vmatpush1.bf16.msra.mxu0 %v2769
    %2849 = vmatprep.subr.bf16.mxu0 0
    %2850 = vmatpush2.bf16.msra.mxu0 %v2784
    %2851 = vmatprep.subr.bf16.mxu0 0
    %2852 = vmatpush2.bf16.msra.mxu0 %v2783
    %2853 = vmatprep.subr.bf16.mxu0 0
    %2854 = vmatpush2.bf16.msra.mxu0 %v2782
    %2855 = vmatprep.subr.bf16.mxu0 0
    %2856 = vmatpush2.bf16.msra.mxu0 %v2781
    %2857 = vmatprep.subr.bf16.mxu0 0
    %2858 = vmatpush2.bf16.msra.mxu0 %v2780
    %2859 = vmatprep.subr.bf16.mxu0 0
    %2860 = vmatpush2.bf16.msra.mxu0 %v2779
    %2861 = vmatprep.subr.bf16.mxu0 0
    %2862 = vmatpush2.bf16.msra.mxu0 %v2778
    %2863 = vmatprep.subr.bf16.mxu0 0
    %2864 = vmatpush2.bf16.msra.mxu0 %v2777
    %2865 = vmatprep.mubr.bf16.mxu0 %v1275
    %2866 = vmatmul.mubr.bf16.gmra.mxu0 %v1274
    %v2867 = vpop.f32.mrf.mxu0
    %v2868 = vadd.f32 %v2636, %v2867
    %v2869 = vpop.f32.mrf.mxu0
    %v2870 = vpop.f32.mrf.mxu0
    %v2871 = vpop.f32.mrf.mxu0
    %2872 = vdwg.mxu0
    %2873 = vmatprep.subr.bf16.mxu0 0
    %2874 = vmatpush1.bf16.msra.mxu0 %v2792
    %2875 = vmatprep.subr.bf16.mxu0 0
    %2876 = vmatpush1.bf16.msra.mxu0 %v2791
    %2877 = vmatprep.subr.bf16.mxu0 0
    %2878 = vmatpush1.bf16.msra.mxu0 %v2790
    %2879 = vmatprep.subr.bf16.mxu0 0
    %2880 = vmatpush1.bf16.msra.mxu0 %v2789
    %2881 = vmatprep.subr.bf16.mxu0 0
    %2882 = vmatpush1.bf16.msra.mxu0 %v2788
    %2883 = vmatprep.subr.bf16.mxu0 0
    %2884 = vmatpush1.bf16.msra.mxu0 %v2787
    %2885 = vmatprep.subr.bf16.mxu0 0
    %2886 = vmatpush1.bf16.msra.mxu0 %v2786
    %2887 = vmatprep.subr.bf16.mxu0 0
    %2888 = vmatpush1.bf16.msra.mxu0 %v2785
    %2889 = vmatprep.subr.bf16.mxu0 0
    %2890 = vmatpush2.bf16.msra.mxu0 %v2800
    %2891 = vmatprep.subr.bf16.mxu0 0
    %2892 = vmatpush2.bf16.msra.mxu0 %v2799
    %2893 = vmatprep.subr.bf16.mxu0 0
    %2894 = vmatpush2.bf16.msra.mxu0 %v2798
    %2895 = vmatprep.subr.bf16.mxu0 0
    %2896 = vmatpush2.bf16.msra.mxu0 %v2797
    %2897 = vmatprep.subr.bf16.mxu0 0
    %2898 = vmatpush2.bf16.msra.mxu0 %v2796
    %2899 = vmatprep.subr.bf16.mxu0 0
    %2900 = vmatpush2.bf16.msra.mxu0 %v2795
    %2901 = vmatprep.subr.bf16.mxu0 0
    %2902 = vmatpush2.bf16.msra.mxu0 %v2794
    %2903 = vmatprep.subr.bf16.mxu0 0
    %2904 = vmatpush2.bf16.msra.mxu0 %v2793
    %2905 = vmatprep.mubr.bf16.mxu0 %v1277
    %2906 = vmatmul.mubr.bf16.gmra.mxu0 %v1276
    %v2907 = vpop.f32.mrf.mxu0
    %v2908 = vadd.f32 %v2868, %v2907
    %v2909 = vpop.f32.mrf.mxu0
    %v2910 = vpop.f32.mrf.mxu0
    %v2911 = vpop.f32.mrf.mxu0
    %2912 = vdwg.mxu0
    %v2913 = vld [vmem:[%s5] sm:$0x1]
    %v2915 = vlaneseq
    %v2916 = vshrl.u32 %v2915, 7
    %v2917 = vsub.s32 0, %v2916
    %v2918 = vrot.slane %v2913, %v2917
    %v2920 = vadd.f32 %v2908, %v2918
    %v2921 = vlaneseq
    %v2922 = vand.u32 %v2921, 127
    %vm2923 = vcmp.lt.s32.totalorder %v2922, 2
    %v2924 = vtanh.pop %v2920
    %v2925 = vsel %vm2923, %v2924, %v2920
    %2926 = vst.msk [vmem:[%s6] sm:$0xff] %vm106, %v2925
    // Predicated region
    $region30: #{forward.1} parent=1 // pred_check
      _
    $region31: #{forward.1} parent=1 // pred_check_branch
      %2928 = sbr.rel (0) target = $region33
    $region32: #{forward.1} parent=1 // pred_region
      _
    $region33: #{forward.1} parent=1 // pred_fallthru
      _
    // Predicated region
    $region34: #{forward.1} parent=1 // pred_check
      _
    $region35: #{forward.1} parent=1 // pred_check_branch
      %2930 = sbr.rel (0) target = $region37
    $region36: #{forward.1} parent=1 // pred_region
      _
    $region37: #{forward.1} parent=1 // pred_fallthru
      _
    %2931 = vsyncpa [#allocation3], 1

</llo_original>
